<compile_context>
chip_gen: v5e
topology: v5e:2x2
jax: 0.10.0
libtpu: 0.0.40
codegen_flags: <defaults>
</compile_context>

<pallas_src>
import jax
import jax.numpy as jnp
from jax.experimental import pallas as pl
from jax.experimental.pallas import tpu as pltpu


# ----------------------------- configuration -----------------------------
N_UTT = 6            # number of utterances actually present in the dialog
MAX_UTT = 8          # max_utt: sequence length after F.pad
SPATIAL = 16         # audio "spectrogram" spatial size
AUDIO_C = 32         # audio encoder output channels (== audio embedding dim)
TEXT_IN = 24         # raw text feature dim per utterance
TEXT_D = 32          # text encoder output dim
FUSE_D = AUDIO_C + TEXT_D   # 64 == LSTM input size
HIDDEN = 32          # LSTM hidden size (bidirectional -> heads see 2*HIDDEN)
NUM_EMOTIONS = 7
NUM_SENTIMENTS = 3
NUM_HEADS_OUT = NUM_EMOTIONS + NUM_SENTIMENTS

# MXU inputs in bf16 with f32 accumulation (native on v5e/v6e/v7x MXUs); every
# elementwise / EUP op stays f32.  Set to jnp.float32 for bit-faithful f32 matmuls.
MXU_IN_DTYPE = jnp.bfloat16


def _mxu_dot(a, b):
    """MXU matmul: bf16 operands, f32 accumulation."""
    return jnp.dot(a.astype(MXU_IN_DTYPE), b.astype(MXU_IN_DTYPE),
                   preferred_element_type=jnp.float32)


# --------------------- the single fused forward kernel ---------------------
def _fused_forward_kernel(patches_ref, w9_ref, cb_ref, pool_ref,
                          text_ref, wt_ref, bt_ref,
                          wih_ref, bih_ref, whh_ref,
                          whead_ref, bhead_ref,
                          emo_ref, sen_ref,
                          lstm_buf):
    h = HIDDEN
    h4 = 4 * HIDDEN
    t_len = lstm_buf.shape[0]          # MAX_UTT

    # ---- audio encoder: im2col conv3x3 + bias + ReLU, GAP as a matmul (all MXU) ----
    conv = _mxu_dot(patches_ref[...], w9_ref[...]) + cb_ref[...]     # (N*S*S, C)
    conv = jnp.maximum(conv, 0.0)                                    # ReLU
    audio_emb = _mxu_dot(pool_ref[...], conv)                        # (N, C)  adaptive_avg_pool2d(1)+flatten

    # ---- text encoder: batched Linear over utterances ----
    text_emb = _mxu_dot(text_ref[...], wt_ref[...]) + bt_ref[...]    # (N, TEXT_D)

    # ---- fuse + zero-pad to MAX_UTT timesteps (matches F.pad before the LSTM) ----
    fused = jnp.concatenate([audio_emb, text_emb], axis=-1)          # (N, FUSE_D)
    n = fused.shape[0]
    if n < t_len:
        fused = jnp.concatenate(
            [fused, jnp.zeros((t_len - n, fused.shape[1]), jnp.float32)], axis=0)

    # ---- hoisted input-to-hidden projection for BOTH directions ----
    # gx columns: [fwd gates i,f,g,o (4H) | bwd gates i,f,g,o (4H)]
    gx = _mxu_dot(fused, wih_ref[...]) + bih_ref[...]                # (T, 8H)

    whh = whh_ref[...].astype(MXU_IN_DTYPE)                          # (H, 8H) = [Whh_f | Whh_b]

    # row 0 = forward state, row 1 = backward state
    h2 = jnp.zeros((2, h), jnp.float32)
    c2 = jnp.zeros((2, h), jnp.float32)

    # Interleaved fwd/bwd recurrence; static trip count (fully unrolled, T = 8).
    for t in range(t_len):
        rt = t_len - 1 - t
        # one hidden-to-hidden matmul covers both directions:
        #   row 0 -> [h_f@Whh_f | h_f@Whh_b], row 1 -> [h_b@Whh_f | h_b@Whh_b]
        hh = jnp.dot(h2.astype(MXU_IN_DTYPE), whh,
                     preferred_element_type=jnp.float32)             # (2, 8H)
        g_f = gx[t:t + 1, 0:h4] + hh[0:1, 0:h4]                      # fwd gates @ time t
        g_b = gx[rt:rt + 1, h4:2 * h4] + hh[1:2, h4:2 * h4]          # bwd gates @ time rt
        gates = jnp.concatenate([g_f, g_b], axis=0)                  # (2, 4H)

        sg = jax.nn.sigmoid(gates)                                   # one EUP pass
        th = jnp.tanh(gates)                                         # one EUP pass
        i_g = sg[:, 0:h]
        f_g = sg[:, h:2 * h]
        g_g = th[:, 2 * h:3 * h]
        o_g = sg[:, 3 * h:4 * h]

        c2 = f_g * c2 + i_g * g_g                                    # (2, H)
        h2 = o_g * jnp.tanh(c2)                                      # (2, H)

        # direct stores of per-timestep outputs (no list + concatenate)
        lstm_buf[t:t + 1, 0:h] = h2[0:1, :]                          # forward output at t
        lstm_buf[rt:rt + 1, h:2 * h] = h2[1:2, :]                    # backward output at rt

    # ---- fused classification heads: one (T, 2H) @ (2H, 10) matmul ----
    logits = _mxu_dot(lstm_buf[...], whead_ref[...]) + bhead_ref[...]  # (T, 10)
    emo_ref[...] = logits[:, 0:NUM_EMOTIONS]
    sen_ref[...] = logits[:, NUM_EMOTIONS:NUM_HEADS_OUT]


# ------------------------------ forward pass ------------------------------
def multimodal_forward(params, audio_dialog_utts, text_dialog_utts):
    n, _, s, _ = audio_dialog_utts.shape
    c = params["conv_w"].shape[0]
    if n > MAX_UTT:
        raise ValueError(f"number of utterances ({n}) exceeds max_utt ({MAX_UTT})")

    # --- tiny one-time prologue (XLA): im2col patches + parameter packing ---
    xpad = jnp.pad(audio_dialog_utts[:, 0], ((0, 0), (1, 1), (1, 1)))   # padding=1, C_in=1
    patches = jnp.stack(
        [xpad[:, ky:ky + s, kx:kx + s] for ky in range(3) for kx in range(3)],
        axis=-1).reshape(n * s * s, 9)                        # row = n*S*S + i*S + j, col = ky*3+kx
    w9 = params["conv_w"].reshape(c, 9).T                     # (9, C), row = ky*3+kx
    # block-averaging matrix: (N, N*S*S); row n averages image n's S*S positions
    pool = jnp.repeat(jnp.eye(n, dtype=jnp.float32), s * s, axis=1) / float(s * s)

    text_x = text_dialog_utts.reshape(n, -1)                  # (N, TEXT_IN)

    wih = jnp.concatenate([params["wih_f"], params["wih_b"]], axis=1)      # (FUSE_D, 8H)
    bih = jnp.concatenate([params["b_f"], params["b_b"]]).reshape(1, -1)   # (1, 8H)
    whh = jnp.concatenate([params["whh_f"], params["whh_b"]], axis=1)      # (H, 8H)
    whead = jnp.concatenate([params["we"], params["ws"]], axis=1)          # (2H, 10)
    bhead = jnp.concatenate([params["be"], params["bs"]]).reshape(1, -1)   # (1, 10)

    nss = n * s * s
    h8 = 8 * HIDDEN

    def full2d(shape):
        return pl.BlockSpec(shape, lambda i: (0, 0))

    emo, sen = pl.pallas_call(
        _fused_forward_kernel,
        out_shape=(jax.ShapeDtypeStruct((MAX_UTT, NUM_EMOTIONS), jnp.float32),
                   jax.ShapeDtypeStruct((MAX_UTT, NUM_SENTIMENTS), jnp.float32)),
        grid=(1,),
        in_specs=[
            full2d((nss, 9)),               # im2col patches
            full2d((9, c)),                 # conv weights
            full2d((1, c)),                 # conv bias
            full2d((n, nss)),               # GAP averaging matrix
            full2d((n, TEXT_IN)),           # text features
            full2d((TEXT_IN, TEXT_D)),      # text linear W
            full2d((1, TEXT_D)),            # text linear b
            full2d((FUSE_D, h8)),           # LSTM W_ih (fwd|bwd)
            full2d((1, h8)),                # LSTM b (fwd|bwd, b_ih + b_hh folded)
            full2d((HIDDEN, h8)),           # LSTM W_hh (fwd|bwd)
            full2d((2 * HIDDEN, NUM_HEADS_OUT)),  # fused head weights
            full2d((1, NUM_HEADS_OUT)),           # fused head biases
        ],
        out_specs=(
            pl.BlockSpec((MAX_UTT, NUM_EMOTIONS), lambda i: (0, 0)),
            pl.BlockSpec((MAX_UTT, NUM_SENTIMENTS), lambda i: (0, 0)),
        ),
        scratch_shapes=[pltpu.VMEM((MAX_UTT, 2 * HIDDEN), jnp.float32)],
        cost_estimate=pl.CostEstimate(flops=2_100_000, transcendentals=5_000,
                                      bytes_accessed=200_000),
    )(patches, w9, params["conv_b"].reshape(1, c), pool,
      text_x, params["wt"], params["bt"].reshape(1, -1),
      wih, bih, whh, whead, bhead)
    return emo, sen


if __name__ == "__main__":
    key = jax.random.PRNGKey(0)
    k = jax.random.split(key, 18)
    sc = 0.1
    params = {
        # audio encoder: Conv2d(1, AUDIO_C, 3, padding=1)
        "conv_w": sc * jax.random.normal(k[0], (AUDIO_C, 1, 3, 3), jnp.float32),
        "conv_b": sc * jax.random.normal(k[1], (AUDIO_C,), jnp.float32),
        # text encoder: Linear(TEXT_IN, TEXT_D)
        "wt": sc * jax.random.normal(k[2], (TEXT_IN, TEXT_D), jnp.float32),
        "bt": sc * jax.random.normal(k[3], (TEXT_D,), jnp.float32),
        # bidirectional LSTM (b_* folds PyTorch's b_ih + b_hh), gate order (i, f, g, o)
        "wih_f": sc * jax.random.normal(k[4], (FUSE_D, 4 * HIDDEN), jnp.float32),
        "whh_f": sc * jax.random.normal(k[5], (HIDDEN, 4 * HIDDEN), jnp.float32),
        "b_f":   sc * jax.random.normal(k[6], (4 * HIDDEN,), jnp.float32),
        "wih_b": sc * jax.random.normal(k[7], (FUSE_D, 4 * HIDDEN), jnp.float32),
        "whh_b": sc * jax.random.normal(k[8], (HIDDEN, 4 * HIDDEN), jnp.float32),
        "b_b":   sc * jax.random.normal(k[9], (4 * HIDDEN,), jnp.float32),
        # classification heads
        "we": sc * jax.random.normal(k[10], (2 * HIDDEN, NUM_EMOTIONS), jnp.float32),
        "be": sc * jax.random.normal(k[11], (NUM_EMOTIONS,), jnp.float32),
        "ws": sc * jax.random.normal(k[12], (2 * HIDDEN, NUM_SENTIMENTS), jnp.float32),
        "bs": sc * jax.random.normal(k[13], (NUM_SENTIMENTS,), jnp.float32),
    }

    audio_dialog_utts = jax.random.normal(k[14], (N_UTT, 1, SPATIAL, SPATIAL), jnp.float32)
    text_dialog_utts = jax.random.normal(k[15], (N_UTT, 1, TEXT_IN), jnp.float32)

    emo, sen = jax.jit(multimodal_forward)(params, audio_dialog_utts, text_dialog_utts)
    jax.block_until_ready((emo, sen))
    assert emo.shape == (MAX_UTT, NUM_EMOTIONS) and emo.dtype == jnp.float32
    assert sen.shape == (MAX_UTT, NUM_SENTIMENTS) and sen.dtype == jnp.float32
    print("KERNEL_OK")
</pallas_src>

<mosaic_0001>
module attributes {stable_mosaic.version = 11 : i64} {
  func.func @_fused_forward_kernel(%arg0: i32, %arg1: memref<1536x9xf32, #tpu.memory_space<vmem>>, %arg2: memref<9x32xf32, #tpu.memory_space<vmem>>, %arg3: memref<1x32xf32, #tpu.memory_space<vmem>>, %arg4: memref<6x1536xf32, #tpu.memory_space<vmem>>, %arg5: memref<6x24xf32, #tpu.memory_space<vmem>>, %arg6: memref<24x32xf32, #tpu.memory_space<vmem>>, %arg7: memref<1x32xf32, #tpu.memory_space<vmem>>, %arg8: memref<64x256xf32, #tpu.memory_space<vmem>>, %arg9: memref<1x256xf32, #tpu.memory_space<vmem>>, %arg10: memref<32x256xf32, #tpu.memory_space<vmem>>, %arg11: memref<64x10xf32, #tpu.memory_space<vmem>>, %arg12: memref<1x10xf32, #tpu.memory_space<vmem>>, %arg13: memref<8x7xf32, #tpu.memory_space<vmem>>, %arg14: memref<8x3xf32, #tpu.memory_space<vmem>>, %arg15: memref<8x64xf32, #tpu.memory_space<vmem>>) attributes {dimension_semantics = [#tpu.dimension_semantics<arbitrary>], iteration_bounds = array<i64: 1>, scalar_prefetch = 0 : i64, scratch_operands = 1 : i64, tpu.core_type = #tpu.core_type<tc>, window_params = [{pipeline_mode = #tpu.pipeline_mode<synchronous>, transform_indices = @transform_0, window_bounds = array<i64: 1536, 9>}, {pipeline_mode = #tpu.pipeline_mode<synchronous>, transform_indices = @transform_1, window_bounds = array<i64: 9, 32>}, {pipeline_mode = #tpu.pipeline_mode<synchronous>, transform_indices = @transform_2, window_bounds = array<i64: 1, 32>}, {pipeline_mode = #tpu.pipeline_mode<synchronous>, transform_indices = @transform_3, window_bounds = array<i64: 6, 1536>}, {pipeline_mode = #tpu.pipeline_mode<synchronous>, transform_indices = @transform_4, window_bounds = array<i64: 6, 24>}, {pipeline_mode = #tpu.pipeline_mode<synchronous>, transform_indices = @transform_5, window_bounds = array<i64: 24, 32>}, {pipeline_mode = #tpu.pipeline_mode<synchronous>, transform_indices = @transform_6, window_bounds = array<i64: 1, 32>}, {pipeline_mode = #tpu.pipeline_mode<synchronous>, transform_indices = @transform_7, window_bounds = array<i64: 64, 256>}, {pipeline_mode = #tpu.pipeline_mode<synchronous>, transform_indices = @transform_8, window_bounds = array<i64: 1, 256>}, {pipeline_mode = #tpu.pipeline_mode<synchronous>, transform_indices = @transform_9, window_bounds = array<i64: 32, 256>}, {pipeline_mode = #tpu.pipeline_mode<synchronous>, transform_indices = @transform_10, window_bounds = array<i64: 64, 10>}, {pipeline_mode = #tpu.pipeline_mode<synchronous>, transform_indices = @transform_11, window_bounds = array<i64: 1, 10>}, {pipeline_mode = #tpu.pipeline_mode<synchronous>, transform_indices = @transform_12, window_bounds = array<i64: 8, 7>}, {pipeline_mode = #tpu.pipeline_mode<synchronous>, transform_indices = @transform_13, window_bounds = array<i64: 8, 3>}]} {
    %c0 = arith.constant 0 : index
    %c0_0 = arith.constant 0 : index
    %0 = vector.load %arg1[%c0, %c0_0] : memref<1536x9xf32, #tpu.memory_space<vmem>>, vector<1536x9xf32>
    %c0_1 = arith.constant 0 : index
    %c0_2 = arith.constant 0 : index
    %1 = vector.load %arg2[%c0_1, %c0_2] : memref<9x32xf32, #tpu.memory_space<vmem>>, vector<9x32xf32>
    %2 = arith.truncf %0 : vector<1536x9xf32> to vector<1536x9xbf16>
    %3 = arith.truncf %1 : vector<9x32xf32> to vector<9x32xbf16>
    %cst = arith.constant dense<0.000000e+00> : vector<1536x32xf32>
    %4 = tpu.matmul %2, %3, %cst {dimension_numbers = #tpu.dot_dimension_numbers<[1], [0], [0], [1], [0, 0, 1, 1], [], []>} : vector<1536x9xbf16>, vector<9x32xbf16>, vector<1536x32xf32> -> vector<1536x32xf32>
    %c0_3 = arith.constant 0 : index
    %c0_4 = arith.constant 0 : index
    %5 = vector.load %arg3[%c0_3, %c0_4] : memref<1x32xf32, #tpu.memory_space<vmem>>, vector<1x32xf32>
    %6 = vector.broadcast %5 : vector<1x32xf32> to vector<1536x32xf32>
    %7 = arith.addf %4, %6 : vector<1536x32xf32>
    %cst_5 = arith.constant 0.000000e+00 : f32
    %8 = vector.broadcast %cst_5 : f32 to vector<1536x32xf32>
    %9 = arith.maximumf %7, %8 : vector<1536x32xf32>
    %c0_6 = arith.constant 0 : index
    %c0_7 = arith.constant 0 : index
    %10 = vector.load %arg4[%c0_6, %c0_7] : memref<6x1536xf32, #tpu.memory_space<vmem>>, vector<6x1536xf32>
    %11 = arith.truncf %10 : vector<6x1536xf32> to vector<6x1536xbf16>
    %12 = arith.truncf %9 : vector<1536x32xf32> to vector<1536x32xbf16>
    %cst_8 = arith.constant dense<0.000000e+00> : vector<6x32xf32>
    %13 = tpu.matmul %11, %12, %cst_8 {dimension_numbers = #tpu.dot_dimension_numbers<[1], [0], [0], [1], [0, 0, 1, 1], [], []>} : vector<6x1536xbf16>, vector<1536x32xbf16>, vector<6x32xf32> -> vector<6x32xf32>
    %c0_9 = arith.constant 0 : index
    %c0_10 = arith.constant 0 : index
    %14 = vector.load %arg5[%c0_9, %c0_10] : memref<6x24xf32, #tpu.memory_space<vmem>>, vector<6x24xf32>
    %c0_11 = arith.constant 0 : index
    %c0_12 = arith.constant 0 : index
    %15 = vector.load %arg6[%c0_11, %c0_12] : memref<24x32xf32, #tpu.memory_space<vmem>>, vector<24x32xf32>
    %16 = arith.truncf %14 : vector<6x24xf32> to vector<6x24xbf16>
    %17 = arith.truncf %15 : vector<24x32xf32> to vector<24x32xbf16>
    %cst_13 = arith.constant dense<0.000000e+00> : vector<6x32xf32>
    %18 = tpu.matmul %16, %17, %cst_13 {dimension_numbers = #tpu.dot_dimension_numbers<[1], [0], [0], [1], [0, 0, 1, 1], [], []>} : vector<6x24xbf16>, vector<24x32xbf16>, vector<6x32xf32> -> vector<6x32xf32>
    %c0_14 = arith.constant 0 : index
    %c0_15 = arith.constant 0 : index
    %19 = vector.load %arg7[%c0_14, %c0_15] : memref<1x32xf32, #tpu.memory_space<vmem>>, vector<1x32xf32>
    %20 = vector.broadcast %19 : vector<1x32xf32> to vector<6x32xf32>
    %21 = arith.addf %18, %20 : vector<6x32xf32>
    %22 = tpu.concatenate %13, %21 in 1 : vector<6x32xf32>, vector<6x32xf32> -> vector<6x64xf32>
    %cst_16 = arith.constant 0.000000e+00 : f32
    %23 = vector.broadcast %cst_16 : f32 to vector<2x64xf32>
    %24 = tpu.concatenate %22, %23 in 0 : vector<6x64xf32>, vector<2x64xf32> -> vector<8x64xf32>
    %c0_17 = arith.constant 0 : index
    %c0_18 = arith.constant 0 : index
    %25 = vector.load %arg8[%c0_17, %c0_18] : memref<64x256xf32, #tpu.memory_space<vmem>>, vector<64x256xf32>
    %26 = arith.truncf %24 : vector<8x64xf32> to vector<8x64xbf16>
    %27 = arith.truncf %25 : vector<64x256xf32> to vector<64x256xbf16>
    %cst_19 = arith.constant dense<0.000000e+00> : vector<8x256xf32>
    %28 = tpu.matmul %26, %27, %cst_19 {dimension_numbers = #tpu.dot_dimension_numbers<[1], [0], [0], [1], [0, 0, 1, 1], [], []>} : vector<8x64xbf16>, vector<64x256xbf16>, vector<8x256xf32> -> vector<8x256xf32>
    %c0_20 = arith.constant 0 : index
    %c0_21 = arith.constant 0 : index
    %29 = vector.load %arg9[%c0_20, %c0_21] : memref<1x256xf32, #tpu.memory_space<vmem>>, vector<1x256xf32>
    %30 = vector.broadcast %29 : vector<1x256xf32> to vector<8x256xf32>
    %31 = arith.addf %28, %30 : vector<8x256xf32>
    %c0_22 = arith.constant 0 : index
    %c0_23 = arith.constant 0 : index
    %32 = vector.load %arg10[%c0_22, %c0_23] : memref<32x256xf32, #tpu.memory_space<vmem>>, vector<32x256xf32>
    %33 = arith.truncf %32 : vector<32x256xf32> to vector<32x256xbf16>
    %cst_24 = arith.constant 0.000000e+00 : f32
    %34 = vector.broadcast %cst_24 : f32 to vector<2x32xf32>
    %cst_25 = arith.constant 0.000000e+00 : f32
    %35 = vector.broadcast %cst_25 : f32 to vector<2x32xf32>
    %36 = arith.truncf %34 : vector<2x32xf32> to vector<2x32xbf16>
    %cst_26 = arith.constant dense<0.000000e+00> : vector<2x256xf32>
    %37 = tpu.matmul %36, %33, %cst_26 {dimension_numbers = #tpu.dot_dimension_numbers<[1], [0], [0], [1], [0, 0, 1, 1], [], []>} : vector<2x32xbf16>, vector<32x256xbf16>, vector<2x256xf32> -> vector<2x256xf32>
    %38 = vector.extract_strided_slice %31 {offsets = [0, 0], sizes = [1, 128], strides = [1, 1]} : vector<8x256xf32> to vector<1x128xf32>
    %39 = vector.extract_strided_slice %37 {offsets = [0, 0], sizes = [1, 128], strides = [1, 1]} : vector<2x256xf32> to vector<1x128xf32>
    %40 = arith.addf %38, %39 : vector<1x128xf32>
    %41 = vector.extract_strided_slice %31 {offsets = [7, 128], sizes = [1, 128], strides = [1, 1]} : vector<8x256xf32> to vector<1x128xf32>
    %42 = vector.extract_strided_slice %37 {offsets = [1, 128], sizes = [1, 128], strides = [1, 1]} : vector<2x256xf32> to vector<1x128xf32>
    %43 = arith.addf %41, %42 : vector<1x128xf32>
    %44 = tpu.concatenate %40, %43 in 0 : vector<1x128xf32>, vector<1x128xf32> -> vector<2x128xf32>
    %45 = arith.negf %44 : vector<2x128xf32>
    %46 = math.exp %45 : vector<2x128xf32>
    %cst_27 = arith.constant 1.000000e+00 : f32
    %47 = vector.broadcast %cst_27 : f32 to vector<2x128xf32>
    %48 = arith.addf %47, %46 : vector<2x128xf32>
    %49 = arith.divf %47, %48 : vector<2x128xf32>
    %50 = math.tanh %44 : vector<2x128xf32>
    %51 = vector.extract_strided_slice %49 {offsets = [0, 0], sizes = [2, 32], strides = [1, 1]} : vector<2x128xf32> to vector<2x32xf32>
    %52 = vector.extract_strided_slice %49 {offsets = [0, 32], sizes = [2, 32], strides = [1, 1]} : vector<2x128xf32> to vector<2x32xf32>
    %53 = vector.extract_strided_slice %50 {offsets = [0, 64], sizes = [2, 32], strides = [1, 1]} : vector<2x128xf32> to vector<2x32xf32>
    %54 = vector.extract_strided_slice %49 {offsets = [0, 96], sizes = [2, 32], strides = [1, 1]} : vector<2x128xf32> to vector<2x32xf32>
    %55 = arith.mulf %52, %35 : vector<2x32xf32>
    %56 = arith.mulf %51, %53 : vector<2x32xf32>
    %57 = arith.addf %55, %56 : vector<2x32xf32>
    %58 = math.tanh %57 : vector<2x32xf32>
    %59 = arith.mulf %54, %58 : vector<2x32xf32>
    %60 = vector.extract_strided_slice %59 {offsets = [0, 0], sizes = [1, 32], strides = [1, 1]} : vector<2x32xf32> to vector<1x32xf32>
    %c0_28 = arith.constant 0 : index
    %c0_29 = arith.constant 0 : index
    %61 = vector.load %arg15[%c0_28, %c0_29] : memref<8x64xf32, #tpu.memory_space<vmem>>, vector<1x32xf32>
    tpu.vector_store %arg15[%c0_28, %c0_29], %60 {strides = array<i32>} : memref<8x64xf32, #tpu.memory_space<vmem>>, vector<1x32xf32>,
    %62 = vector.extract_strided_slice %59 {offsets = [1, 0], sizes = [1, 32], strides = [1, 1]} : vector<2x32xf32> to vector<1x32xf32>
    %c7 = arith.constant 7 : index
    %c32 = arith.constant 32 : index
    %63 = vector.load %arg15[%c7, %c32] : memref<8x64xf32, #tpu.memory_space<vmem>>, vector<1x32xf32>
    tpu.vector_store %arg15[%c7, %c32], %62 {strides = array<i32>} : memref<8x64xf32, #tpu.memory_space<vmem>>, vector<1x32xf32>,
    %64 = arith.truncf %59 : vector<2x32xf32> to vector<2x32xbf16>
    %cst_30 = arith.constant dense<0.000000e+00> : vector<2x256xf32>
    %65 = tpu.matmul %64, %33, %cst_30 {dimension_numbers = #tpu.dot_dimension_numbers<[1], [0], [0], [1], [0, 0, 1, 1], [], []>} : vector<2x32xbf16>, vector<32x256xbf16>, vector<2x256xf32> -> vector<2x256xf32>
    %66 = vector.extract_strided_slice %31 {offsets = [1, 0], sizes = [1, 128], strides = [1, 1]} : vector<8x256xf32> to vector<1x128xf32>
    %67 = vector.extract_strided_slice %65 {offsets = [0, 0], sizes = [1, 128], strides = [1, 1]} : vector<2x256xf32> to vector<1x128xf32>
    %68 = arith.addf %66, %67 : vector<1x128xf32>
    %69 = vector.extract_strided_slice %31 {offsets = [6, 128], sizes = [1, 128], strides = [1, 1]} : vector<8x256xf32> to vector<1x128xf32>
    %70 = vector.extract_strided_slice %65 {offsets = [1, 128], sizes = [1, 128], strides = [1, 1]} : vector<2x256xf32> to vector<1x128xf32>
    %71 = arith.addf %69, %70 : vector<1x128xf32>
    %72 = tpu.concatenate %68, %71 in 0 : vector<1x128xf32>, vector<1x128xf32> -> vector<2x128xf32>
    %73 = arith.negf %72 : vector<2x128xf32>
    %74 = math.exp %73 : vector<2x128xf32>
    %cst_31 = arith.constant 1.000000e+00 : f32
    %75 = vector.broadcast %cst_31 : f32 to vector<2x128xf32>
    %76 = arith.addf %75, %74 : vector<2x128xf32>
    %77 = arith.divf %75, %76 : vector<2x128xf32>
    %78 = math.tanh %72 : vector<2x128xf32>
    %79 = vector.extract_strided_slice %77 {offsets = [0, 0], sizes = [2, 32], strides = [1, 1]} : vector<2x128xf32> to vector<2x32xf32>
    %80 = vector.extract_strided_slice %77 {offsets = [0, 32], sizes = [2, 32], strides = [1, 1]} : vector<2x128xf32> to vector<2x32xf32>
    %81 = vector.extract_strided_slice %78 {offsets = [0, 64], sizes = [2, 32], strides = [1, 1]} : vector<2x128xf32> to vector<2x32xf32>
    %82 = vector.extract_strided_slice %77 {offsets = [0, 96], sizes = [2, 32], strides = [1, 1]} : vector<2x128xf32> to vector<2x32xf32>
    %83 = arith.mulf %80, %57 : vector<2x32xf32>
    %84 = arith.mulf %79, %81 : vector<2x32xf32>
    %85 = arith.addf %83, %84 : vector<2x32xf32>
    %86 = math.tanh %85 : vector<2x32xf32>
    %87 = arith.mulf %82, %86 : vector<2x32xf32>
    %88 = vector.extract_strided_slice %87 {offsets = [0, 0], sizes = [1, 32], strides = [1, 1]} : vector<2x32xf32> to vector<1x32xf32>
    %c1 = arith.constant 1 : index
    %c0_32 = arith.constant 0 : index
    %89 = vector.load %arg15[%c1, %c0_32] : memref<8x64xf32, #tpu.memory_space<vmem>>, vector<1x32xf32>
    tpu.vector_store %arg15[%c1, %c0_32], %88 {strides = array<i32>} : memref<8x64xf32, #tpu.memory_space<vmem>>, vector<1x32xf32>,
    %90 = vector.extract_strided_slice %87 {offsets = [1, 0], sizes = [1, 32], strides = [1, 1]} : vector<2x32xf32> to vector<1x32xf32>
    %c6 = arith.constant 6 : index
    %c32_33 = arith.constant 32 : index
    %91 = vector.load %arg15[%c6, %c32_33] : memref<8x64xf32, #tpu.memory_space<vmem>>, vector<1x32xf32>
    tpu.vector_store %arg15[%c6, %c32_33], %90 {strides = array<i32>} : memref<8x64xf32, #tpu.memory_space<vmem>>, vector<1x32xf32>,
    %92 = arith.truncf %87 : vector<2x32xf32> to vector<2x32xbf16>
    %cst_34 = arith.constant dense<0.000000e+00> : vector<2x256xf32>
    %93 = tpu.matmul %92, %33, %cst_34 {dimension_numbers = #tpu.dot_dimension_numbers<[1], [0], [0], [1], [0, 0, 1, 1], [], []>} : vector<2x32xbf16>, vector<32x256xbf16>, vector<2x256xf32> -> vector<2x256xf32>
    %94 = vector.extract_strided_slice %31 {offsets = [2, 0], sizes = [1, 128], strides = [1, 1]} : vector<8x256xf32> to vector<1x128xf32>
    %95 = vector.extract_strided_slice %93 {offsets = [0, 0], sizes = [1, 128], strides = [1, 1]} : vector<2x256xf32> to vector<1x128xf32>
    %96 = arith.addf %94, %95 : vector<1x128xf32>
    %97 = vector.extract_strided_slice %31 {offsets = [5, 128], sizes = [1, 128], strides = [1, 1]} : vector<8x256xf32> to vector<1x128xf32>
    %98 = vector.extract_strided_slice %93 {offsets = [1, 128], sizes = [1, 128], strides = [1, 1]} : vector<2x256xf32> to vector<1x128xf32>
    %99 = arith.addf %97, %98 : vector<1x128xf32>
    %100 = tpu.concatenate %96, %99 in 0 : vector<1x128xf32>, vector<1x128xf32> -> vector<2x128xf32>
    %101 = arith.negf %100 : vector<2x128xf32>
    %102 = math.exp %101 : vector<2x128xf32>
    %cst_35 = arith.constant 1.000000e+00 : f32
    %103 = vector.broadcast %cst_35 : f32 to vector<2x128xf32>
    %104 = arith.addf %103, %102 : vector<2x128xf32>
    %105 = arith.divf %103, %104 : vector<2x128xf32>
    %106 = math.tanh %100 : vector<2x128xf32>
    %107 = vector.extract_strided_slice %105 {offsets = [0, 0], sizes = [2, 32], strides = [1, 1]} : vector<2x128xf32> to vector<2x32xf32>
    %108 = vector.extract_strided_slice %105 {offsets = [0, 32], sizes = [2, 32], strides = [1, 1]} : vector<2x128xf32> to vector<2x32xf32>
    %109 = vector.extract_strided_slice %106 {offsets = [0, 64], sizes = [2, 32], strides = [1, 1]} : vector<2x128xf32> to vector<2x32xf32>
    %110 = vector.extract_strided_slice %105 {offsets = [0, 96], sizes = [2, 32], strides = [1, 1]} : vector<2x128xf32> to vector<2x32xf32>
    %111 = arith.mulf %108, %85 : vector<2x32xf32>
    %112 = arith.mulf %107, %109 : vector<2x32xf32>
    %113 = arith.addf %111, %112 : vector<2x32xf32>
    %114 = math.tanh %113 : vector<2x32xf32>
    %115 = arith.mulf %110, %114 : vector<2x32xf32>
    %116 = vector.extract_strided_slice %115 {offsets = [0, 0], sizes = [1, 32], strides = [1, 1]} : vector<2x32xf32> to vector<1x32xf32>
    %c2 = arith.constant 2 : index
    %c0_36 = arith.constant 0 : index
    %117 = vector.load %arg15[%c2, %c0_36] : memref<8x64xf32, #tpu.memory_space<vmem>>, vector<1x32xf32>
    tpu.vector_store %arg15[%c2, %c0_36], %116 {strides = array<i32>} : memref<8x64xf32, #tpu.memory_space<vmem>>, vector<1x32xf32>,
    %118 = vector.extract_strided_slice %115 {offsets = [1, 0], sizes = [1, 32], strides = [1, 1]} : vector<2x32xf32> to vector<1x32xf32>
    %c5 = arith.constant 5 : index
    %c32_37 = arith.constant 32 : index
    %119 = vector.load %arg15[%c5, %c32_37] : memref<8x64xf32, #tpu.memory_space<vmem>>, vector<1x32xf32>
    tpu.vector_store %arg15[%c5, %c32_37], %118 {strides = array<i32>} : memref<8x64xf32, #tpu.memory_space<vmem>>, vector<1x32xf32>,
    %120 = arith.truncf %115 : vector<2x32xf32> to vector<2x32xbf16>
    %cst_38 = arith.constant dense<0.000000e+00> : vector<2x256xf32>
    %121 = tpu.matmul %120, %33, %cst_38 {dimension_numbers = #tpu.dot_dimension_numbers<[1], [0], [0], [1], [0, 0, 1, 1], [], []>} : vector<2x32xbf16>, vector<32x256xbf16>, vector<2x256xf32> -> vector<2x256xf32>
    %122 = vector.extract_strided_slice %31 {offsets = [3, 0], sizes = [1, 128], strides = [1, 1]} : vector<8x256xf32> to vector<1x128xf32>
    %123 = vector.extract_strided_slice %121 {offsets = [0, 0], sizes = [1, 128], strides = [1, 1]} : vector<2x256xf32> to vector<1x128xf32>
    %124 = arith.addf %122, %123 : vector<1x128xf32>
    %125 = vector.extract_strided_slice %31 {offsets = [4, 128], sizes = [1, 128], strides = [1, 1]} : vector<8x256xf32> to vector<1x128xf32>
    %126 = vector.extract_strided_slice %121 {offsets = [1, 128], sizes = [1, 128], strides = [1, 1]} : vector<2x256xf32> to vector<1x128xf32>
    %127 = arith.addf %125, %126 : vector<1x128xf32>
    %128 = tpu.concatenate %124, %127 in 0 : vector<1x128xf32>, vector<1x128xf32> -> vector<2x128xf32>
    %129 = arith.negf %128 : vector<2x128xf32>
    %130 = math.exp %129 : vector<2x128xf32>
    %cst_39 = arith.constant 1.000000e+00 : f32
    %131 = vector.broadcast %cst_39 : f32 to vector<2x128xf32>
    %132 = arith.addf %131, %130 : vector<2x128xf32>
    %133 = arith.divf %131, %132 : vector<2x128xf32>
    %134 = math.tanh %128 : vector<2x128xf32>
    %135 = vector.extract_strided_slice %133 {offsets = [0, 0], sizes = [2, 32], strides = [1, 1]} : vector<2x128xf32> to vector<2x32xf32>
    %136 = vector.extract_strided_slice %133 {offsets = [0, 32], sizes = [2, 32], strides = [1, 1]} : vector<2x128xf32> to vector<2x32xf32>
    %137 = vector.extract_strided_slice %134 {offsets = [0, 64], sizes = [2, 32], strides = [1, 1]} : vector<2x128xf32> to vector<2x32xf32>
    %138 = vector.extract_strided_slice %133 {offsets = [0, 96], sizes = [2, 32], strides = [1, 1]} : vector<2x128xf32> to vector<2x32xf32>
    %139 = arith.mulf %136, %113 : vector<2x32xf32>
    %140 = arith.mulf %135, %137 : vector<2x32xf32>
    %141 = arith.addf %139, %140 : vector<2x32xf32>
    %142 = math.tanh %141 : vector<2x32xf32>
    %143 = arith.mulf %138, %142 : vector<2x32xf32>
    %144 = vector.extract_strided_slice %143 {offsets = [0, 0], sizes = [1, 32], strides = [1, 1]} : vector<2x32xf32> to vector<1x32xf32>
    %c3 = arith.constant 3 : index
    %c0_40 = arith.constant 0 : index
    %145 = vector.load %arg15[%c3, %c0_40] : memref<8x64xf32, #tpu.memory_space<vmem>>, vector<1x32xf32>
    tpu.vector_store %arg15[%c3, %c0_40], %144 {strides = array<i32>} : memref<8x64xf32, #tpu.memory_space<vmem>>, vector<1x32xf32>,
    %146 = vector.extract_strided_slice %143 {offsets = [1, 0], sizes = [1, 32], strides = [1, 1]} : vector<2x32xf32> to vector<1x32xf32>
    %c4 = arith.constant 4 : index
    %c32_41 = arith.constant 32 : index
    %147 = vector.load %arg15[%c4, %c32_41] : memref<8x64xf32, #tpu.memory_space<vmem>>, vector<1x32xf32>
    tpu.vector_store %arg15[%c4, %c32_41], %146 {strides = array<i32>} : memref<8x64xf32, #tpu.memory_space<vmem>>, vector<1x32xf32>,
    %148 = arith.truncf %143 : vector<2x32xf32> to vector<2x32xbf16>
    %cst_42 = arith.constant dense<0.000000e+00> : vector<2x256xf32>
    %149 = tpu.matmul %148, %33, %cst_42 {dimension_numbers = #tpu.dot_dimension_numbers<[1], [0], [0], [1], [0, 0, 1, 1], [], []>} : vector<2x32xbf16>, vector<32x256xbf16>, vector<2x256xf32> -> vector<2x256xf32>
    %150 = vector.extract_strided_slice %31 {offsets = [4, 0], sizes = [1, 128], strides = [1, 1]} : vector<8x256xf32> to vector<1x128xf32>
    %151 = vector.extract_strided_slice %149 {offsets = [0, 0], sizes = [1, 128], strides = [1, 1]} : vector<2x256xf32> to vector<1x128xf32>
    %152 = arith.addf %150, %151 : vector<1x128xf32>
    %153 = vector.extract_strided_slice %31 {offsets = [3, 128], sizes = [1, 128], strides = [1, 1]} : vector<8x256xf32> to vector<1x128xf32>
    %154 = vector.extract_strided_slice %149 {offsets = [1, 128], sizes = [1, 128], strides = [1, 1]} : vector<2x256xf32> to vector<1x128xf32>
    %155 = arith.addf %153, %154 : vector<1x128xf32>
    %156 = tpu.concatenate %152, %155 in 0 : vector<1x128xf32>, vector<1x128xf32> -> vector<2x128xf32>
    %157 = arith.negf %156 : vector<2x128xf32>
    %158 = math.exp %157 : vector<2x128xf32>
    %cst_43 = arith.constant 1.000000e+00 : f32
    %159 = vector.broadcast %cst_43 : f32 to vector<2x128xf32>
    %160 = arith.addf %159, %158 : vector<2x128xf32>
    %161 = arith.divf %159, %160 : vector<2x128xf32>
    %162 = math.tanh %156 : vector<2x128xf32>
    %163 = vector.extract_strided_slice %161 {offsets = [0, 0], sizes = [2, 32], strides = [1, 1]} : vector<2x128xf32> to vector<2x32xf32>
    %164 = vector.extract_strided_slice %161 {offsets = [0, 32], sizes = [2, 32], strides = [1, 1]} : vector<2x128xf32> to vector<2x32xf32>
    %165 = vector.extract_strided_slice %162 {offsets = [0, 64], sizes = [2, 32], strides = [1, 1]} : vector<2x128xf32> to vector<2x32xf32>
    %166 = vector.extract_strided_slice %161 {offsets = [0, 96], sizes = [2, 32], strides = [1, 1]} : vector<2x128xf32> to vector<2x32xf32>
    %167 = arith.mulf %164, %141 : vector<2x32xf32>
    %168 = arith.mulf %163, %165 : vector<2x32xf32>
    %169 = arith.addf %167, %168 : vector<2x32xf32>
    %170 = math.tanh %169 : vector<2x32xf32>
    %171 = arith.mulf %166, %170 : vector<2x32xf32>
    %172 = vector.extract_strided_slice %171 {offsets = [0, 0], sizes = [1, 32], strides = [1, 1]} : vector<2x32xf32> to vector<1x32xf32>
    %c4_44 = arith.constant 4 : index
    %c0_45 = arith.constant 0 : index
    %173 = vector.load %arg15[%c4_44, %c0_45] : memref<8x64xf32, #tpu.memory_space<vmem>>, vector<1x32xf32>
    tpu.vector_store %arg15[%c4_44, %c0_45], %172 {strides = array<i32>} : memref<8x64xf32, #tpu.memory_space<vmem>>, vector<1x32xf32>,
    %174 = vector.extract_strided_slice %171 {offsets = [1, 0], sizes = [1, 32], strides = [1, 1]} : vector<2x32xf32> to vector<1x32xf32>
    %c3_46 = arith.constant 3 : index
    %c32_47 = arith.constant 32 : index
    %175 = vector.load %arg15[%c3_46, %c32_47] : memref<8x64xf32, #tpu.memory_space<vmem>>, vector<1x32xf32>
    tpu.vector_store %arg15[%c3_46, %c32_47], %174 {strides = array<i32>} : memref<8x64xf32, #tpu.memory_space<vmem>>, vector<1x32xf32>,
    %176 = arith.truncf %171 : vector<2x32xf32> to vector<2x32xbf16>
    %cst_48 = arith.constant dense<0.000000e+00> : vector<2x256xf32>
    %177 = tpu.matmul %176, %33, %cst_48 {dimension_numbers = #tpu.dot_dimension_numbers<[1], [0], [0], [1], [0, 0, 1, 1], [], []>} : vector<2x32xbf16>, vector<32x256xbf16>, vector<2x256xf32> -> vector<2x256xf32>
    %178 = vector.extract_strided_slice %31 {offsets = [5, 0], sizes = [1, 128], strides = [1, 1]} : vector<8x256xf32> to vector<1x128xf32>
    %179 = vector.extract_strided_slice %177 {offsets = [0, 0], sizes = [1, 128], strides = [1, 1]} : vector<2x256xf32> to vector<1x128xf32>
    %180 = arith.addf %178, %179 : vector<1x128xf32>
    %181 = vector.extract_strided_slice %31 {offsets = [2, 128], sizes = [1, 128], strides = [1, 1]} : vector<8x256xf32> to vector<1x128xf32>
    %182 = vector.extract_strided_slice %177 {offsets = [1, 128], sizes = [1, 128], strides = [1, 1]} : vector<2x256xf32> to vector<1x128xf32>
    %183 = arith.addf %181, %182 : vector<1x128xf32>
    %184 = tpu.concatenate %180, %183 in 0 : vector<1x128xf32>, vector<1x128xf32> -> vector<2x128xf32>
    %185 = arith.negf %184 : vector<2x128xf32>
    %186 = math.exp %185 : vector<2x128xf32>
    %cst_49 = arith.constant 1.000000e+00 : f32
    %187 = vector.broadcast %cst_49 : f32 to vector<2x128xf32>
    %188 = arith.addf %187, %186 : vector<2x128xf32>
    %189 = arith.divf %187, %188 : vector<2x128xf32>
    %190 = math.tanh %184 : vector<2x128xf32>
    %191 = vector.extract_strided_slice %189 {offsets = [0, 0], sizes = [2, 32], strides = [1, 1]} : vector<2x128xf32> to vector<2x32xf32>
    %192 = vector.extract_strided_slice %189 {offsets = [0, 32], sizes = [2, 32], strides = [1, 1]} : vector<2x128xf32> to vector<2x32xf32>
    %193 = vector.extract_strided_slice %190 {offsets = [0, 64], sizes = [2, 32], strides = [1, 1]} : vector<2x128xf32> to vector<2x32xf32>
    %194 = vector.extract_strided_slice %189 {offsets = [0, 96], sizes = [2, 32], strides = [1, 1]} : vector<2x128xf32> to vector<2x32xf32>
    %195 = arith.mulf %192, %169 : vector<2x32xf32>
    %196 = arith.mulf %191, %193 : vector<2x32xf32>
    %197 = arith.addf %195, %196 : vector<2x32xf32>
    %198 = math.tanh %197 : vector<2x32xf32>
    %199 = arith.mulf %194, %198 : vector<2x32xf32>
    %200 = vector.extract_strided_slice %199 {offsets = [0, 0], sizes = [1, 32], strides = [1, 1]} : vector<2x32xf32> to vector<1x32xf32>
    %c5_50 = arith.constant 5 : index
    %c0_51 = arith.constant 0 : index
    %201 = vector.load %arg15[%c5_50, %c0_51] : memref<8x64xf32, #tpu.memory_space<vmem>>, vector<1x32xf32>
    tpu.vector_store %arg15[%c5_50, %c0_51], %200 {strides = array<i32>} : memref<8x64xf32, #tpu.memory_space<vmem>>, vector<1x32xf32>,
    %202 = vector.extract_strided_slice %199 {offsets = [1, 0], sizes = [1, 32], strides = [1, 1]} : vector<2x32xf32> to vector<1x32xf32>
    %c2_52 = arith.constant 2 : index
    %c32_53 = arith.constant 32 : index
    %203 = vector.load %arg15[%c2_52, %c32_53] : memref<8x64xf32, #tpu.memory_space<vmem>>, vector<1x32xf32>
    tpu.vector_store %arg15[%c2_52, %c32_53], %202 {strides = array<i32>} : memref<8x64xf32, #tpu.memory_space<vmem>>, vector<1x32xf32>,
    %204 = arith.truncf %199 : vector<2x32xf32> to vector<2x32xbf16>
    %cst_54 = arith.constant dense<0.000000e+00> : vector<2x256xf32>
    %205 = tpu.matmul %204, %33, %cst_54 {dimension_numbers = #tpu.dot_dimension_numbers<[1], [0], [0], [1], [0, 0, 1, 1], [], []>} : vector<2x32xbf16>, vector<32x256xbf16>, vector<2x256xf32> -> vector<2x256xf32>
    %206 = vector.extract_strided_slice %31 {offsets = [6, 0], sizes = [1, 128], strides = [1, 1]} : vector<8x256xf32> to vector<1x128xf32>
    %207 = vector.extract_strided_slice %205 {offsets = [0, 0], sizes = [1, 128], strides = [1, 1]} : vector<2x256xf32> to vector<1x128xf32>
    %208 = arith.addf %206, %207 : vector<1x128xf32>
    %209 = vector.extract_strided_slice %31 {offsets = [1, 128], sizes = [1, 128], strides = [1, 1]} : vector<8x256xf32> to vector<1x128xf32>
    %210 = vector.extract_strided_slice %205 {offsets = [1, 128], sizes = [1, 128], strides = [1, 1]} : vector<2x256xf32> to vector<1x128xf32>
    %211 = arith.addf %209, %210 : vector<1x128xf32>
    %212 = tpu.concatenate %208, %211 in 0 : vector<1x128xf32>, vector<1x128xf32> -> vector<2x128xf32>
    %213 = arith.negf %212 : vector<2x128xf32>
    %214 = math.exp %213 : vector<2x128xf32>
    %cst_55 = arith.constant 1.000000e+00 : f32
    %215 = vector.broadcast %cst_55 : f32 to vector<2x128xf32>
    %216 = arith.addf %215, %214 : vector<2x128xf32>
    %217 = arith.divf %215, %216 : vector<2x128xf32>
    %218 = math.tanh %212 : vector<2x128xf32>
    %219 = vector.extract_strided_slice %217 {offsets = [0, 0], sizes = [2, 32], strides = [1, 1]} : vector<2x128xf32> to vector<2x32xf32>
    %220 = vector.extract_strided_slice %217 {offsets = [0, 32], sizes = [2, 32], strides = [1, 1]} : vector<2x128xf32> to vector<2x32xf32>
    %221 = vector.extract_strided_slice %218 {offsets = [0, 64], sizes = [2, 32], strides = [1, 1]} : vector<2x128xf32> to vector<2x32xf32>
    %222 = vector.extract_strided_slice %217 {offsets = [0, 96], sizes = [2, 32], strides = [1, 1]} : vector<2x128xf32> to vector<2x32xf32>
    %223 = arith.mulf %220, %197 : vector<2x32xf32>
    %224 = arith.mulf %219, %221 : vector<2x32xf32>
    %225 = arith.addf %223, %224 : vector<2x32xf32>
    %226 = math.tanh %225 : vector<2x32xf32>
    %227 = arith.mulf %222, %226 : vector<2x32xf32>
    %228 = vector.extract_strided_slice %227 {offsets = [0, 0], sizes = [1, 32], strides = [1, 1]} : vector<2x32xf32> to vector<1x32xf32>
    %c6_56 = arith.constant 6 : index
    %c0_57 = arith.constant 0 : index
    %229 = vector.load %arg15[%c6_56, %c0_57] : memref<8x64xf32, #tpu.memory_space<vmem>>, vector<1x32xf32>
    tpu.vector_store %arg15[%c6_56, %c0_57], %228 {strides = array<i32>} : memref<8x64xf32, #tpu.memory_space<vmem>>, vector<1x32xf32>,
    %230 = vector.extract_strided_slice %227 {offsets = [1, 0], sizes = [1, 32], strides = [1, 1]} : vector<2x32xf32> to vector<1x32xf32>
    %c1_58 = arith.constant 1 : index
    %c32_59 = arith.constant 32 : index
    %231 = vector.load %arg15[%c1_58, %c32_59] : memref<8x64xf32, #tpu.memory_space<vmem>>, vector<1x32xf32>
    tpu.vector_store %arg15[%c1_58, %c32_59], %230 {strides = array<i32>} : memref<8x64xf32, #tpu.memory_space<vmem>>, vector<1x32xf32>,
    %232 = arith.truncf %227 : vector<2x32xf32> to vector<2x32xbf16>
    %cst_60 = arith.constant dense<0.000000e+00> : vector<2x256xf32>
    %233 = tpu.matmul %232, %33, %cst_60 {dimension_numbers = #tpu.dot_dimension_numbers<[1], [0], [0], [1], [0, 0, 1, 1], [], []>} : vector<2x32xbf16>, vector<32x256xbf16>, vector<2x256xf32> -> vector<2x256xf32>
    %234 = vector.extract_strided_slice %31 {offsets = [7, 0], sizes = [1, 128], strides = [1, 1]} : vector<8x256xf32> to vector<1x128xf32>
    %235 = vector.extract_strided_slice %233 {offsets = [0, 0], sizes = [1, 128], strides = [1, 1]} : vector<2x256xf32> to vector<1x128xf32>
    %236 = arith.addf %234, %235 : vector<1x128xf32>
    %237 = vector.extract_strided_slice %31 {offsets = [0, 128], sizes = [1, 128], strides = [1, 1]} : vector<8x256xf32> to vector<1x128xf32>
    %238 = vector.extract_strided_slice %233 {offsets = [1, 128], sizes = [1, 128], strides = [1, 1]} : vector<2x256xf32> to vector<1x128xf32>
    %239 = arith.addf %237, %238 : vector<1x128xf32>
    %240 = tpu.concatenate %236, %239 in 0 : vector<1x128xf32>, vector<1x128xf32> -> vector<2x128xf32>
    %241 = arith.negf %240 : vector<2x128xf32>
    %242 = math.exp %241 : vector<2x128xf32>
    %cst_61 = arith.constant 1.000000e+00 : f32
    %243 = vector.broadcast %cst_61 : f32 to vector<2x128xf32>
    %244 = arith.addf %243, %242 : vector<2x128xf32>
    %245 = arith.divf %243, %244 : vector<2x128xf32>
    %246 = math.tanh %240 : vector<2x128xf32>
    %247 = vector.extract_strided_slice %245 {offsets = [0, 0], sizes = [2, 32], strides = [1, 1]} : vector<2x128xf32> to vector<2x32xf32>
    %248 = vector.extract_strided_slice %245 {offsets = [0, 32], sizes = [2, 32], strides = [1, 1]} : vector<2x128xf32> to vector<2x32xf32>
    %249 = vector.extract_strided_slice %246 {offsets = [0, 64], sizes = [2, 32], strides = [1, 1]} : vector<2x128xf32> to vector<2x32xf32>
    %250 = vector.extract_strided_slice %245 {offsets = [0, 96], sizes = [2, 32], strides = [1, 1]} : vector<2x128xf32> to vector<2x32xf32>
    %251 = arith.mulf %248, %225 : vector<2x32xf32>
    %252 = arith.mulf %247, %249 : vector<2x32xf32>
    %253 = arith.addf %251, %252 : vector<2x32xf32>
    %254 = math.tanh %253 : vector<2x32xf32>
    %255 = arith.mulf %250, %254 : vector<2x32xf32>
    %256 = vector.extract_strided_slice %255 {offsets = [0, 0], sizes = [1, 32], strides = [1, 1]} : vector<2x32xf32> to vector<1x32xf32>
    %c7_62 = arith.constant 7 : index
    %c0_63 = arith.constant 0 : index
    %257 = vector.load %arg15[%c7_62, %c0_63] : memref<8x64xf32, #tpu.memory_space<vmem>>, vector<1x32xf32>
    tpu.vector_store %arg15[%c7_62, %c0_63], %256 {strides = array<i32>} : memref<8x64xf32, #tpu.memory_space<vmem>>, vector<1x32xf32>,
    %258 = vector.extract_strided_slice %255 {offsets = [1, 0], sizes = [1, 32], strides = [1, 1]} : vector<2x32xf32> to vector<1x32xf32>
    %c0_64 = arith.constant 0 : index
    %c32_65 = arith.constant 32 : index
    %259 = vector.load %arg15[%c0_64, %c32_65] : memref<8x64xf32, #tpu.memory_space<vmem>>, vector<1x32xf32>
    tpu.vector_store %arg15[%c0_64, %c32_65], %258 {strides = array<i32>} : memref<8x64xf32, #tpu.memory_space<vmem>>, vector<1x32xf32>,
    %c0_66 = arith.constant 0 : index
    %c0_67 = arith.constant 0 : index
    %260 = vector.load %arg15[%c0_66, %c0_67] : memref<8x64xf32, #tpu.memory_space<vmem>>, vector<8x64xf32>
    %c0_68 = arith.constant 0 : index
    %c0_69 = arith.constant 0 : index
    %261 = vector.load %arg11[%c0_68, %c0_69] : memref<64x10xf32, #tpu.memory_space<vmem>>, vector<64x10xf32>
    %262 = arith.truncf %260 : vector<8x64xf32> to vector<8x64xbf16>
    %263 = arith.truncf %261 : vector<64x10xf32> to vector<64x10xbf16>
    %cst_70 = arith.constant dense<0.000000e+00> : vector<8x10xf32>
    %264 = tpu.matmul %262, %263, %cst_70 {dimension_numbers = #tpu.dot_dimension_numbers<[1], [0], [0], [1], [0, 0, 1, 1], [], []>} : vector<8x64xbf16>, vector<64x10xbf16>, vector<8x10xf32> -> vector<8x10xf32>
    %c0_71 = arith.constant 0 : index
    %c0_72 = arith.constant 0 : index
    %265 = vector.load %arg12[%c0_71, %c0_72] : memref<1x10xf32, #tpu.memory_space<vmem>>, vector<1x10xf32>
    %266 = vector.broadcast %265 : vector<1x10xf32> to vector<8x10xf32>
    %267 = arith.addf %264, %266 : vector<8x10xf32>
    %268 = vector.extract_strided_slice %267 {offsets = [0, 0], sizes = [8, 7], strides = [1, 1]} : vector<8x10xf32> to vector<8x7xf32>
    %c0_73 = arith.constant 0 : index
    %c0_74 = arith.constant 0 : index
    %269 = vector.load %arg13[%c0_73, %c0_74] : memref<8x7xf32, #tpu.memory_space<vmem>>, vector<8x7xf32>
    tpu.vector_store %arg13[%c0_73, %c0_74], %268 {strides = array<i32>} : memref<8x7xf32, #tpu.memory_space<vmem>>, vector<8x7xf32>,
    %270 = vector.extract_strided_slice %267 {offsets = [0, 7], sizes = [8, 3], strides = [1, 1]} : vector<8x10xf32> to vector<8x3xf32>
    %c0_75 = arith.constant 0 : index
    %c0_76 = arith.constant 0 : index
    %271 = vector.load %arg14[%c0_75, %c0_76] : memref<8x3xf32, #tpu.memory_space<vmem>>, vector<8x3xf32>
    tpu.vector_store %arg14[%c0_75, %c0_76], %270 {strides = array<i32>} : memref<8x3xf32, #tpu.memory_space<vmem>>, vector<8x3xf32>,
    return
  }
  func.func @transform_0(%arg0: i32) -> (i32, i32) {
    %c0_i32 = arith.constant 0 : i32
    %c0_i32_0 = arith.constant 0 : i32
    %c0_i32_1 = arith.constant 0 : i32
    return %c0_i32, %c0_i32_0 : i32, i32
  }
  func.func @transform_1(%arg0: i32) -> (i32, i32) {
    %c0_i32 = arith.constant 0 : i32
    %c0_i32_0 = arith.constant 0 : i32
    %c0_i32_1 = arith.constant 0 : i32
    return %c0_i32, %c0_i32_0 : i32, i32
  }
  func.func @transform_2(%arg0: i32) -> (i32, i32) {
    %c0_i32 = arith.constant 0 : i32
    %c0_i32_0 = arith.constant 0 : i32
    %c0_i32_1 = arith.constant 0 : i32
    return %c0_i32, %c0_i32_0 : i32, i32
  }
  func.func @transform_3(%arg0: i32) -> (i32, i32) {
    %c0_i32 = arith.constant 0 : i32
    %c0_i32_0 = arith.constant 0 : i32
    %c0_i32_1 = arith.constant 0 : i32
    return %c0_i32, %c0_i32_0 : i32, i32
  }
  func.func @transform_4(%arg0: i32) -> (i32, i32) {
    %c0_i32 = arith.constant 0 : i32
    %c0_i32_0 = arith.constant 0 : i32
    %c0_i32_1 = arith.constant 0 : i32
    return %c0_i32, %c0_i32_0 : i32, i32
  }
  func.func @transform_5(%arg0: i32) -> (i32, i32) {
    %c0_i32 = arith.constant 0 : i32
    %c0_i32_0 = arith.constant 0 : i32
    %c0_i32_1 = arith.constant 0 : i32
    return %c0_i32, %c0_i32_0 : i32, i32
  }
  func.func @transform_6(%arg0: i32) -> (i32, i32) {
    %c0_i32 = arith.constant 0 : i32
    %c0_i32_0 = arith.constant 0 : i32
    %c0_i32_1 = arith.constant 0 : i32
    return %c0_i32, %c0_i32_0 : i32, i32
  }
  func.func @transform_7(%arg0: i32) -> (i32, i32) {
    %c0_i32 = arith.constant 0 : i32
    %c0_i32_0 = arith.constant 0 : i32
    %c0_i32_1 = arith.constant 0 : i32
    return %c0_i32, %c0_i32_0 : i32, i32
  }
  func.func @transform_8(%arg0: i32) -> (i32, i32) {
    %c0_i32 = arith.constant 0 : i32
    %c0_i32_0 = arith.constant 0 : i32
    %c0_i32_1 = arith.constant 0 : i32
    return %c0_i32, %c0_i32_0 : i32, i32
  }
  func.func @transform_9(%arg0: i32) -> (i32, i32) {
    %c0_i32 = arith.constant 0 : i32
    %c0_i32_0 = arith.constant 0 : i32
    %c0_i32_1 = arith.constant 0 : i32
    return %c0_i32, %c0_i32_0 : i32, i32
  }
  func.func @transform_10(%arg0: i32) -> (i32, i32) {
    %c0_i32 = arith.constant 0 : i32
    %c0_i32_0 = arith.constant 0 : i32
    %c0_i32_1 = arith.constant 0 : i32
    return %c0_i32, %c0_i32_0 : i32, i32
  }
  func.func @transform_11(%arg0: i32) -> (i32, i32) {
    %c0_i32 = arith.constant 0 : i32
    %c0_i32_0 = arith.constant 0 : i32
    %c0_i32_1 = arith.constant 0 : i32
    return %c0_i32, %c0_i32_0 : i32, i32
  }
  func.func @transform_12(%arg0: i32) -> (i32, i32) {
    %c0_i32 = arith.constant 0 : i32
    %c0_i32_0 = arith.constant 0 : i32
    %c0_i32_1 = arith.constant 0 : i32
    return %c0_i32, %c0_i32_0 : i32, i32
  }
  func.func @transform_13(%arg0: i32) -> (i32, i32) {
    %c0_i32 = arith.constant 0 : i32
    %c0_i32_0 = arith.constant 0 : i32
    %c0_i32_1 = arith.constant 0 : i32
    return %c0_i32, %c0_i32_0 : i32, i32
  }
}

</mosaic_0001>

<llo_original>
// kernel: multimodal_forward.1
$region0: #{multimodal_forward.1}
  #allocation0 [shape = 'u32[]', space=smem, size = 0x4, offset = 0x4, fixed_abs, tag = 'smem constant byte address 0x4 - core index']
  #allocation1 [shape = 'u32[72,128]{1,0:T(1,128)}', space=vmem, size = 0x9000, scoped, tag = 'internal scratch']
  #allocation2 [shape = 'f32[8,64]{1,0:T(8,128)}', space=vmem, size = 0x1000, scoped, tag = 'scratch operand']
  %s0 = inlined_call_operand.vmem [shape: f32[1536,9], index: 0, kind: input, shape index: {}]
  %s1 = inlined_call_operand.vmem [shape: f32[9,32], index: 1, kind: input, shape index: {}]
  %s2 = inlined_call_operand.vmem [shape: f32[1,32], index: 2, kind: input, shape index: {}]
  %s3 = inlined_call_operand.vmem [shape: f32[6,1536], index: 3, kind: input, shape index: {}]
  %s4 = inlined_call_operand.vmem [shape: f32[6,24], index: 4, kind: input, shape index: {}]
  %s5 = inlined_call_operand.vmem [shape: f32[24,32], index: 5, kind: input, shape index: {}]
  %s6 = inlined_call_operand.vmem [shape: f32[1,32], index: 6, kind: input, shape index: {}]
  %s7 = inlined_call_operand.vmem [shape: f32[64,256], index: 7, kind: input, shape index: {}]
  %s8 = inlined_call_operand.vmem [shape: f32[1,256], index: 8, kind: input, shape index: {}]
  %s9 = inlined_call_operand.vmem [shape: f32[32,256], index: 9, kind: input, shape index: {}]
  %s10 = inlined_call_operand.vmem [shape: f32[64,10], index: 10, kind: input, shape index: {}]
  %s11 = inlined_call_operand.vmem [shape: f32[1,10], index: 11, kind: input, shape index: {}]
  %s12 = inlined_call_operand.hbm [shape: f32[8,7], index: 12, kind: output, shape index: {0}]
  %s13 = inlined_call_operand.vmem [shape: f32[8,3], index: 13, kind: output, shape index: {1}]
  %14 = xla_tuple %s12, %s13
  %s15 = sld [smem:[#allocation0]]
  $region66: #{multimodal_forward.1} parent=0
    _
  %s17 = ssub.s32 1, %s15
  %s18 = scalar_select 0, %s17, %s15
  $region1: #{multimodal_forward.1} parent=0
    #allocation3 [shape = 'u8[4096]{0}', space=vmem, size = 0x1000, scoped, tag = 'output window, operand 0, single buffered']
    #allocation4 [shape = 's32[1]{0}', space=sflag, size = 0x4, scoped, tag = 'scoped memory for multimodal_forward.1']
    %19 = vsyncpa [#allocation4], 0
    // Predicated region
    $region2: #{multimodal_forward.1} parent=1 // pred_check
      _
    $region3: #{multimodal_forward.1} parent=1 // pred_check_branch
      %21 = sbr.rel (0) target = $region5
    $region4: #{multimodal_forward.1} parent=1 // pred_region
      _
    $region5: #{multimodal_forward.1} parent=1 // pred_fallthru
      _
    // Predicated region
    $region6: #{multimodal_forward.1} parent=1 // pred_check
      _
    $region7: #{multimodal_forward.1} parent=1 // pred_check_branch
      %23 = sbr.rel (0) target = $region9
    $region8: #{multimodal_forward.1} parent=1 // pred_region
      _
    $region9: #{multimodal_forward.1} parent=1 // pred_fallthru
      _
    // Predicated region
    $region10: #{multimodal_forward.1} parent=1 // pred_check
      _
    $region11: #{multimodal_forward.1} parent=1 // pred_check_branch
      %25 = sbr.rel (0) target = $region13
    $region12: #{multimodal_forward.1} parent=1 // pred_region
      _
    $region13: #{multimodal_forward.1} parent=1 // pred_fallthru
      _
    // Predicated region
    $region14: #{multimodal_forward.1} parent=1 // pred_check
      _
    $region15: #{multimodal_forward.1} parent=1 // pred_check_branch
      %27 = sbr.rel (0) target = $region17
    $region16: #{multimodal_forward.1} parent=1 // pred_region
      _
    $region17: #{multimodal_forward.1} parent=1 // pred_fallthru
      _
    // Predicated region
    $region18: #{multimodal_forward.1} parent=1 // pred_check
      _
    $region19: #{multimodal_forward.1} parent=1 // pred_check_branch
      %29 = sbr.rel (0) target = $region21
    $region20: #{multimodal_forward.1} parent=1 // pred_region
      _
    $region21: #{multimodal_forward.1} parent=1 // pred_fallthru
      _
    // Predicated region
    $region22: #{multimodal_forward.1} parent=1 // pred_check
      _
    $region23: #{multimodal_forward.1} parent=1 // pred_check_branch
      %31 = sbr.rel (0) target = $region25
    $region24: #{multimodal_forward.1} parent=1 // pred_region
      _
    $region25: #{multimodal_forward.1} parent=1 // pred_fallthru
      _
    // Predicated region
    $region26: #{multimodal_forward.1} parent=1 // pred_check
      _
    $region27: #{multimodal_forward.1} parent=1 // pred_check_branch
      %33 = sbr.rel (0) target = $region29
    $region28: #{multimodal_forward.1} parent=1 // pred_region
      _
    $region29: #{multimodal_forward.1} parent=1 // pred_fallthru
      _
    // Predicated region
    $region30: #{multimodal_forward.1} parent=1 // pred_check
      _
    $region31: #{multimodal_forward.1} parent=1 // pred_check_branch
      %35 = sbr.rel (0) target = $region33
    $region32: #{multimodal_forward.1} parent=1 // pred_region
      _
    $region33: #{multimodal_forward.1} parent=1 // pred_fallthru
      _
    // Predicated region
    $region34: #{multimodal_forward.1} parent=1 // pred_check
      _
    $region35: #{multimodal_forward.1} parent=1 // pred_check_branch
      %37 = sbr.rel (0) target = $region37
    $region36: #{multimodal_forward.1} parent=1 // pred_region
      _
    $region37: #{multimodal_forward.1} parent=1 // pred_fallthru
      _
    // Predicated region
    $region38: #{multimodal_forward.1} parent=1 // pred_check
      _
    $region39: #{multimodal_forward.1} parent=1 // pred_check_branch
      %39 = sbr.rel (0) target = $region41
    $region40: #{multimodal_forward.1} parent=1 // pred_region
      _
    $region41: #{multimodal_forward.1} parent=1 // pred_fallthru
      _
    // Predicated region
    $region42: #{multimodal_forward.1} parent=1 // pred_check
      _
    $region43: #{multimodal_forward.1} parent=1 // pred_check_branch
      %41 = sbr.rel (0) target = $region45
    $region44: #{multimodal_forward.1} parent=1 // pred_region
      _
    $region45: #{multimodal_forward.1} parent=1 // pred_fallthru
      _
    // Predicated region
    $region46: #{multimodal_forward.1} parent=1 // pred_check
      _
    $region47: #{multimodal_forward.1} parent=1 // pred_check_branch
      %43 = sbr.rel (0) target = $region49
    $region48: #{multimodal_forward.1} parent=1 // pred_region
      _
    $region49: #{multimodal_forward.1} parent=1 // pred_fallthru
      _
    %v45 = vld [vmem:[%s0] sm:$0xff]
    %v46 = vld [vmem:[%s0 + $0x8] sm:$0xff]
    %v47 = vld [vmem:[%s0 + $0x10] sm:$0xff]
    %v48 = vld [vmem:[%s0 + $0x18] sm:$0xff]
    %v49 = vld [vmem:[%s0 + $0x20] sm:$0xff]
    %v50 = vld [vmem:[%s0 + $0x28] sm:$0xff]
    %v51 = vld [vmem:[%s0 + $0x30] sm:$0xff]
    %v52 = vld [vmem:[%s0 + $0x38] sm:$0xff]
    %v53 = vld [vmem:[%s0 + $0x40] sm:$0xff]
    %v54 = vld [vmem:[%s0 + $0x48] sm:$0xff]
    %v55 = vld [vmem:[%s0 + $0x50] sm:$0xff]
    %v56 = vld [vmem:[%s0 + $0x58] sm:$0xff]
    %v57 = vld [vmem:[%s0 + $0x60] sm:$0xff]
    %v58 = vld [vmem:[%s0 + $0x68] sm:$0xff]
    %v59 = vld [vmem:[%s0 + $0x70] sm:$0xff]
    %v60 = vld [vmem:[%s0 + $0x78] sm:$0xff]
    %v61 = vld [vmem:[%s0 + $0x80] sm:$0xff]
    %v62 = vld [vmem:[%s0 + $0x88] sm:$0xff]
    %v63 = vld [vmem:[%s0 + $0x90] sm:$0xff]
    %v64 = vld [vmem:[%s0 + $0x98] sm:$0xff]
    %v65 = vld [vmem:[%s0 + $0xa0] sm:$0xff]
    %v66 = vld [vmem:[%s0 + $0xa8] sm:$0xff]
    %v67 = vld [vmem:[%s0 + $0xb0] sm:$0xff]
    %v68 = vld [vmem:[%s0 + $0xb8] sm:$0xff]
    %v69 = vld [vmem:[%s0 + $0xc0] sm:$0xff]
    %v70 = vld [vmem:[%s0 + $0xc8] sm:$0xff]
    %v71 = vld [vmem:[%s0 + $0xd0] sm:$0xff]
    %v72 = vld [vmem:[%s0 + $0xd8] sm:$0xff]
    %v73 = vld [vmem:[%s0 + $0xe0] sm:$0xff]
    %v74 = vld [vmem:[%s0 + $0xe8] sm:$0xff]
    %v75 = vld [vmem:[%s0 + $0xf0] sm:$0xff]
    %v76 = vld [vmem:[%s0 + $0xf8] sm:$0xff]
    %v77 = vld [vmem:[%s0 + $0x100] sm:$0xff]
    %v78 = vld [vmem:[%s0 + $0x108] sm:$0xff]
    %v79 = vld [vmem:[%s0 + $0x110] sm:$0xff]
    %v80 = vld [vmem:[%s0 + $0x118] sm:$0xff]
    %v81 = vld [vmem:[%s0 + $0x120] sm:$0xff]
    %v82 = vld [vmem:[%s0 + $0x128] sm:$0xff]
    %v83 = vld [vmem:[%s0 + $0x130] sm:$0xff]
    %v84 = vld [vmem:[%s0 + $0x138] sm:$0xff]
    %v85 = vld [vmem:[%s0 + $0x140] sm:$0xff]
    %v86 = vld [vmem:[%s0 + $0x148] sm:$0xff]
    %v87 = vld [vmem:[%s0 + $0x150] sm:$0xff]
    %v88 = vld [vmem:[%s0 + $0x158] sm:$0xff]
    %v89 = vld [vmem:[%s0 + $0x160] sm:$0xff]
    %v90 = vld [vmem:[%s0 + $0x168] sm:$0xff]
    %v91 = vld [vmem:[%s0 + $0x170] sm:$0xff]
    %v92 = vld [vmem:[%s0 + $0x178] sm:$0xff]
    %v93 = vld [vmem:[%s0 + $0x180] sm:$0xff]
    %v94 = vld [vmem:[%s0 + $0x188] sm:$0xff]
    %v95 = vld [vmem:[%s0 + $0x190] sm:$0xff]
    %v96 = vld [vmem:[%s0 + $0x198] sm:$0xff]
    %v97 = vld [vmem:[%s0 + $0x1a0] sm:$0xff]
    %v98 = vld [vmem:[%s0 + $0x1a8] sm:$0xff]
    %v99 = vld [vmem:[%s0 + $0x1b0] sm:$0xff]
    %v100 = vld [vmem:[%s0 + $0x1b8] sm:$0xff]
    %v101 = vld [vmem:[%s0 + $0x1c0] sm:$0xff]
    %v102 = vld [vmem:[%s0 + $0x1c8] sm:$0xff]
    %v103 = vld [vmem:[%s0 + $0x1d0] sm:$0xff]
    %v104 = vld [vmem:[%s0 + $0x1d8] sm:$0xff]
    %v105 = vld [vmem:[%s0 + $0x1e0] sm:$0xff]
    %v106 = vld [vmem:[%s0 + $0x1e8] sm:$0xff]
    %v107 = vld [vmem:[%s0 + $0x1f0] sm:$0xff]
    %v108 = vld [vmem:[%s0 + $0x1f8] sm:$0xff]
    %v109 = vld [vmem:[%s0 + $0x200] sm:$0xff]
    %v110 = vld [vmem:[%s0 + $0x208] sm:$0xff]
    %v111 = vld [vmem:[%s0 + $0x210] sm:$0xff]
    %v112 = vld [vmem:[%s0 + $0x218] sm:$0xff]
    %v113 = vld [vmem:[%s0 + $0x220] sm:$0xff]
    %v114 = vld [vmem:[%s0 + $0x228] sm:$0xff]
    %v115 = vld [vmem:[%s0 + $0x230] sm:$0xff]
    %v116 = vld [vmem:[%s0 + $0x238] sm:$0xff]
    %v117 = vld [vmem:[%s0 + $0x240] sm:$0xff]
    %v118 = vld [vmem:[%s0 + $0x248] sm:$0xff]
    %v119 = vld [vmem:[%s0 + $0x250] sm:$0xff]
    %v120 = vld [vmem:[%s0 + $0x258] sm:$0xff]
    %v121 = vld [vmem:[%s0 + $0x260] sm:$0xff]
    %v122 = vld [vmem:[%s0 + $0x268] sm:$0xff]
    %v123 = vld [vmem:[%s0 + $0x270] sm:$0xff]
    %v124 = vld [vmem:[%s0 + $0x278] sm:$0xff]
    %v125 = vld [vmem:[%s0 + $0x280] sm:$0xff]
    %v126 = vld [vmem:[%s0 + $0x288] sm:$0xff]
    %v127 = vld [vmem:[%s0 + $0x290] sm:$0xff]
    %v128 = vld [vmem:[%s0 + $0x298] sm:$0xff]
    %v129 = vld [vmem:[%s0 + $0x2a0] sm:$0xff]
    %v130 = vld [vmem:[%s0 + $0x2a8] sm:$0xff]
    %v131 = vld [vmem:[%s0 + $0x2b0] sm:$0xff]
    %v132 = vld [vmem:[%s0 + $0x2b8] sm:$0xff]
    %v133 = vld [vmem:[%s0 + $0x2c0] sm:$0xff]
    %v134 = vld [vmem:[%s0 + $0x2c8] sm:$0xff]
    %v135 = vld [vmem:[%s0 + $0x2d0] sm:$0xff]
    %v136 = vld [vmem:[%s0 + $0x2d8] sm:$0xff]
    %v137 = vld [vmem:[%s0 + $0x2e0] sm:$0xff]
    %v138 = vld [vmem:[%s0 + $0x2e8] sm:$0xff]
    %v139 = vld [vmem:[%s0 + $0x2f0] sm:$0xff]
    %v140 = vld [vmem:[%s0 + $0x2f8] sm:$0xff]
    %v141 = vld [vmem:[%s0 + $0x300] sm:$0xff]
    %v142 = vld [vmem:[%s0 + $0x308] sm:$0xff]
    %v143 = vld [vmem:[%s0 + $0x310] sm:$0xff]
    %v144 = vld [vmem:[%s0 + $0x318] sm:$0xff]
    %v145 = vld [vmem:[%s0 + $0x320] sm:$0xff]
    %v146 = vld [vmem:[%s0 + $0x328] sm:$0xff]
    %v147 = vld [vmem:[%s0 + $0x330] sm:$0xff]
    %v148 = vld [vmem:[%s0 + $0x338] sm:$0xff]
    %v149 = vld [vmem:[%s0 + $0x340] sm:$0xff]
    %v150 = vld [vmem:[%s0 + $0x348] sm:$0xff]
    %v151 = vld [vmem:[%s0 + $0x350] sm:$0xff]
    %v152 = vld [vmem:[%s0 + $0x358] sm:$0xff]
    %v153 = vld [vmem:[%s0 + $0x360] sm:$0xff]
    %v154 = vld [vmem:[%s0 + $0x368] sm:$0xff]
    %v155 = vld [vmem:[%s0 + $0x370] sm:$0xff]
    %v156 = vld [vmem:[%s0 + $0x378] sm:$0xff]
    %v157 = vld [vmem:[%s0 + $0x380] sm:$0xff]
    %v158 = vld [vmem:[%s0 + $0x388] sm:$0xff]
    %v159 = vld [vmem:[%s0 + $0x390] sm:$0xff]
    %v160 = vld [vmem:[%s0 + $0x398] sm:$0xff]
    %v161 = vld [vmem:[%s0 + $0x3a0] sm:$0xff]
    %v162 = vld [vmem:[%s0 + $0x3a8] sm:$0xff]
    %v163 = vld [vmem:[%s0 + $0x3b0] sm:$0xff]
    %v164 = vld [vmem:[%s0 + $0x3b8] sm:$0xff]
    %v165 = vld [vmem:[%s0 + $0x3c0] sm:$0xff]
    %v166 = vld [vmem:[%s0 + $0x3c8] sm:$0xff]
    %v167 = vld [vmem:[%s0 + $0x3d0] sm:$0xff]
    %v168 = vld [vmem:[%s0 + $0x3d8] sm:$0xff]
    %v169 = vld [vmem:[%s0 + $0x3e0] sm:$0xff]
    %v170 = vld [vmem:[%s0 + $0x3e8] sm:$0xff]
    %v171 = vld [vmem:[%s0 + $0x3f0] sm:$0xff]
    %v172 = vld [vmem:[%s0 + $0x3f8] sm:$0xff]
    %v173 = vld [vmem:[%s0 + $0x400] sm:$0xff]
    %v174 = vld [vmem:[%s0 + $0x408] sm:$0xff]
    %v175 = vld [vmem:[%s0 + $0x410] sm:$0xff]
    %v176 = vld [vmem:[%s0 + $0x418] sm:$0xff]
    %v177 = vld [vmem:[%s0 + $0x420] sm:$0xff]
    %v178 = vld [vmem:[%s0 + $0x428] sm:$0xff]
    %v179 = vld [vmem:[%s0 + $0x430] sm:$0xff]
    %v180 = vld [vmem:[%s0 + $0x438] sm:$0xff]
    %v181 = vld [vmem:[%s0 + $0x440] sm:$0xff]
    %v182 = vld [vmem:[%s0 + $0x448] sm:$0xff]
    %v183 = vld [vmem:[%s0 + $0x450] sm:$0xff]
    %v184 = vld [vmem:[%s0 + $0x458] sm:$0xff]
    %v185 = vld [vmem:[%s0 + $0x460] sm:$0xff]
    %v186 = vld [vmem:[%s0 + $0x468] sm:$0xff]
    %v187 = vld [vmem:[%s0 + $0x470] sm:$0xff]
    %v188 = vld [vmem:[%s0 + $0x478] sm:$0xff]
    %v189 = vld [vmem:[%s0 + $0x480] sm:$0xff]
    %v190 = vld [vmem:[%s0 + $0x488] sm:$0xff]
    %v191 = vld [vmem:[%s0 + $0x490] sm:$0xff]
    %v192 = vld [vmem:[%s0 + $0x498] sm:$0xff]
    %v193 = vld [vmem:[%s0 + $0x4a0] sm:$0xff]
    %v194 = vld [vmem:[%s0 + $0x4a8] sm:$0xff]
    %v195 = vld [vmem:[%s0 + $0x4b0] sm:$0xff]
    %v196 = vld [vmem:[%s0 + $0x4b8] sm:$0xff]
    %v197 = vld [vmem:[%s0 + $0x4c0] sm:$0xff]
    %v198 = vld [vmem:[%s0 + $0x4c8] sm:$0xff]
    %v199 = vld [vmem:[%s0 + $0x4d0] sm:$0xff]
    %v200 = vld [vmem:[%s0 + $0x4d8] sm:$0xff]
    %v201 = vld [vmem:[%s0 + $0x4e0] sm:$0xff]
    %v202 = vld [vmem:[%s0 + $0x4e8] sm:$0xff]
    %v203 = vld [vmem:[%s0 + $0x4f0] sm:$0xff]
    %v204 = vld [vmem:[%s0 + $0x4f8] sm:$0xff]
    %v205 = vld [vmem:[%s0 + $0x500] sm:$0xff]
    %v206 = vld [vmem:[%s0 + $0x508] sm:$0xff]
    %v207 = vld [vmem:[%s0 + $0x510] sm:$0xff]
    %v208 = vld [vmem:[%s0 + $0x518] sm:$0xff]
    %v209 = vld [vmem:[%s0 + $0x520] sm:$0xff]
    %v210 = vld [vmem:[%s0 + $0x528] sm:$0xff]
    %v211 = vld [vmem:[%s0 + $0x530] sm:$0xff]
    %v212 = vld [vmem:[%s0 + $0x538] sm:$0xff]
    %v213 = vld [vmem:[%s0 + $0x540] sm:$0xff]
    %v214 = vld [vmem:[%s0 + $0x548] sm:$0xff]
    %v215 = vld [vmem:[%s0 + $0x550] sm:$0xff]
    %v216 = vld [vmem:[%s0 + $0x558] sm:$0xff]
    %v217 = vld [vmem:[%s0 + $0x560] sm:$0xff]
    %v218 = vld [vmem:[%s0 + $0x568] sm:$0xff]
    %v219 = vld [vmem:[%s0 + $0x570] sm:$0xff]
    %v220 = vld [vmem:[%s0 + $0x578] sm:$0xff]
    %v221 = vld [vmem:[%s0 + $0x580] sm:$0xff]
    %v222 = vld [vmem:[%s0 + $0x588] sm:$0xff]
    %v223 = vld [vmem:[%s0 + $0x590] sm:$0xff]
    %v224 = vld [vmem:[%s0 + $0x598] sm:$0xff]
    %v225 = vld [vmem:[%s0 + $0x5a0] sm:$0xff]
    %v226 = vld [vmem:[%s0 + $0x5a8] sm:$0xff]
    %v227 = vld [vmem:[%s0 + $0x5b0] sm:$0xff]
    %v228 = vld [vmem:[%s0 + $0x5b8] sm:$0xff]
    %v229 = vld [vmem:[%s0 + $0x5c0] sm:$0xff]
    %v230 = vld [vmem:[%s0 + $0x5c8] sm:$0xff]
    %v231 = vld [vmem:[%s0 + $0x5d0] sm:$0xff]
    %v232 = vld [vmem:[%s0 + $0x5d8] sm:$0xff]
    %v233 = vld [vmem:[%s0 + $0x5e0] sm:$0xff]
    %v234 = vld [vmem:[%s0 + $0x5e8] sm:$0xff]
    %v235 = vld [vmem:[%s0 + $0x5f0] sm:$0xff]
    %v236 = vld [vmem:[%s0 + $0x5f8] sm:$0xff]
    %v237 = vld [vmem:[%s1] sm:$0xff]
    %v238 = vld [vmem:[%s1 + $0x8] sm:$0x1]
    %v239 = vpack.c.bf16 %v46, %v45
    %v240 = vpack.c.bf16 %v48, %v47
    %v241 = vpack.c.bf16 %v50, %v49
    %v242 = vpack.c.bf16 %v52, %v51
    %v243 = vpack.c.bf16 %v54, %v53
    %v244 = vpack.c.bf16 %v56, %v55
    %v245 = vpack.c.bf16 %v58, %v57
    %v246 = vpack.c.bf16 %v60, %v59
    %v247 = vpack.c.bf16 %v62, %v61
    %v248 = vpack.c.bf16 %v64, %v63
    %v249 = vpack.c.bf16 %v66, %v65
    %v250 = vpack.c.bf16 %v68, %v67
    %v251 = vpack.c.bf16 %v70, %v69
    %v252 = vpack.c.bf16 %v72, %v71
    %v253 = vpack.c.bf16 %v74, %v73
    %v254 = vpack.c.bf16 %v76, %v75
    %v255 = vpack.c.bf16 %v78, %v77
    %v256 = vpack.c.bf16 %v80, %v79
    %v257 = vpack.c.bf16 %v82, %v81
    %v258 = vpack.c.bf16 %v84, %v83
    %v259 = vpack.c.bf16 %v86, %v85
    %v260 = vpack.c.bf16 %v88, %v87
    %v261 = vpack.c.bf16 %v90, %v89
    %v262 = vpack.c.bf16 %v92, %v91
    %v263 = vpack.c.bf16 %v94, %v93
    %v264 = vpack.c.bf16 %v96, %v95
    %v265 = vpack.c.bf16 %v98, %v97
    %v266 = vpack.c.bf16 %v100, %v99
    %v267 = vpack.c.bf16 %v102, %v101
    %v268 = vpack.c.bf16 %v104, %v103
    %v269 = vpack.c.bf16 %v106, %v105
    %v270 = vpack.c.bf16 %v108, %v107
    %v271 = vpack.c.bf16 %v110, %v109
    %v272 = vpack.c.bf16 %v112, %v111
    %v273 = vpack.c.bf16 %v114, %v113
    %v274 = vpack.c.bf16 %v116, %v115
    %v275 = vpack.c.bf16 %v118, %v117
    %v276 = vpack.c.bf16 %v120, %v119
    %v277 = vpack.c.bf16 %v122, %v121
    %v278 = vpack.c.bf16 %v124, %v123
    %v279 = vpack.c.bf16 %v126, %v125
    %v280 = vpack.c.bf16 %v128, %v127
    %v281 = vpack.c.bf16 %v130, %v129
    %v282 = vpack.c.bf16 %v132, %v131
    %v283 = vpack.c.bf16 %v134, %v133
    %v284 = vpack.c.bf16 %v136, %v135
    %v285 = vpack.c.bf16 %v138, %v137
    %v286 = vpack.c.bf16 %v140, %v139
    %v287 = vpack.c.bf16 %v142, %v141
    %v288 = vpack.c.bf16 %v144, %v143
    %v289 = vpack.c.bf16 %v146, %v145
    %v290 = vpack.c.bf16 %v148, %v147
    %v291 = vpack.c.bf16 %v150, %v149
    %v292 = vpack.c.bf16 %v152, %v151
    %v293 = vpack.c.bf16 %v154, %v153
    %v294 = vpack.c.bf16 %v156, %v155
    %v295 = vpack.c.bf16 %v158, %v157
    %v296 = vpack.c.bf16 %v160, %v159
    %v297 = vpack.c.bf16 %v162, %v161
    %v298 = vpack.c.bf16 %v164, %v163
    %v299 = vpack.c.bf16 %v166, %v165
    %v300 = vpack.c.bf16 %v168, %v167
    %v301 = vpack.c.bf16 %v170, %v169
    %v302 = vpack.c.bf16 %v172, %v171
    %v303 = vpack.c.bf16 %v174, %v173
    %v304 = vpack.c.bf16 %v176, %v175
    %v305 = vpack.c.bf16 %v178, %v177
    %v306 = vpack.c.bf16 %v180, %v179
    %v307 = vpack.c.bf16 %v182, %v181
    %v308 = vpack.c.bf16 %v184, %v183
    %v309 = vpack.c.bf16 %v186, %v185
    %v310 = vpack.c.bf16 %v188, %v187
    %v311 = vpack.c.bf16 %v190, %v189
    %v312 = vpack.c.bf16 %v192, %v191
    %v313 = vpack.c.bf16 %v194, %v193
    %v314 = vpack.c.bf16 %v196, %v195
    %v315 = vpack.c.bf16 %v198, %v197
    %v316 = vpack.c.bf16 %v200, %v199
    %v317 = vpack.c.bf16 %v202, %v201
    %v318 = vpack.c.bf16 %v204, %v203
    %v319 = vpack.c.bf16 %v206, %v205
    %v320 = vpack.c.bf16 %v208, %v207
    %v321 = vpack.c.bf16 %v210, %v209
    %v322 = vpack.c.bf16 %v212, %v211
    %v323 = vpack.c.bf16 %v214, %v213
    %v324 = vpack.c.bf16 %v216, %v215
    %v325 = vpack.c.bf16 %v218, %v217
    %v326 = vpack.c.bf16 %v220, %v219
    %v327 = vpack.c.bf16 %v222, %v221
    %v328 = vpack.c.bf16 %v224, %v223
    %v329 = vpack.c.bf16 %v226, %v225
    %v330 = vpack.c.bf16 %v228, %v227
    %v331 = vpack.c.bf16 %v230, %v229
    %v332 = vpack.c.bf16 %v232, %v231
    %v333 = vpack.c.bf16 %v234, %v233
    %v334 = vpack.c.bf16 %v236, %v235
    %v335 = vpack.c.bf16 %v238, %v237
    %v336 = vld [vmem:[%s2] sm:$0x1]
    %v338 = vperm.slane %v336, 0
    %vm340 = vcmask 72704
    %v342 = vsel %vm340, %v239, 0
    %v345 = vsel %vm340, %v240, 0
    %v348 = vsel %vm340, %v241, 0
    %v351 = vsel %vm340, %v242, 0
    %v354 = vsel %vm340, %v243, 0
    %v357 = vsel %vm340, %v244, 0
    %v360 = vsel %vm340, %v245, 0
    %v363 = vsel %vm340, %v246, 0
    %v366 = vsel %vm340, %v247, 0
    %v369 = vsel %vm340, %v248, 0
    %v372 = vsel %vm340, %v249, 0
    %v375 = vsel %vm340, %v250, 0
    %v378 = vsel %vm340, %v251, 0
    %v381 = vsel %vm340, %v252, 0
    %v384 = vsel %vm340, %v253, 0
    %v387 = vsel %vm340, %v254, 0
    %v390 = vsel %vm340, %v255, 0
    %v393 = vsel %vm340, %v256, 0
    %v396 = vsel %vm340, %v257, 0
    %v399 = vsel %vm340, %v258, 0
    %v402 = vsel %vm340, %v259, 0
    %v405 = vsel %vm340, %v260, 0
    %v408 = vsel %vm340, %v261, 0
    %v411 = vsel %vm340, %v262, 0
    %v414 = vsel %vm340, %v263, 0
    %v417 = vsel %vm340, %v264, 0
    %v420 = vsel %vm340, %v265, 0
    %v423 = vsel %vm340, %v266, 0
    %v426 = vsel %vm340, %v267, 0
    %v429 = vsel %vm340, %v268, 0
    %v432 = vsel %vm340, %v269, 0
    %v435 = vsel %vm340, %v270, 0
    %v438 = vsel %vm340, %v271, 0
    %v441 = vsel %vm340, %v272, 0
    %v444 = vsel %vm340, %v273, 0
    %v447 = vsel %vm340, %v274, 0
    %v450 = vsel %vm340, %v275, 0
    %v453 = vsel %vm340, %v276, 0
    %v456 = vsel %vm340, %v277, 0
    %v459 = vsel %vm340, %v278, 0
    %v462 = vsel %vm340, %v279, 0
    %v465 = vsel %vm340, %v280, 0
    %v468 = vsel %vm340, %v281, 0
    %v471 = vsel %vm340, %v282, 0
    %v474 = vsel %vm340, %v283, 0
    %v477 = vsel %vm340, %v284, 0
    %v480 = vsel %vm340, %v285, 0
    %v483 = vsel %vm340, %v286, 0
    %v486 = vsel %vm340, %v287, 0
    %v489 = vsel %vm340, %v288, 0
    %v492 = vsel %vm340, %v289, 0
    %v495 = vsel %vm340, %v290, 0
    %v498 = vsel %vm340, %v291, 0
    %v501 = vsel %vm340, %v292, 0
    %v504 = vsel %vm340, %v293, 0
    %v507 = vsel %vm340, %v294, 0
    %v510 = vsel %vm340, %v295, 0
    %v513 = vsel %vm340, %v296, 0
    %v516 = vsel %vm340, %v297, 0
    %v519 = vsel %vm340, %v298, 0
    %v522 = vsel %vm340, %v299, 0
    %v525 = vsel %vm340, %v300, 0
    %v528 = vsel %vm340, %v301, 0
    %v531 = vsel %vm340, %v302, 0
    %v534 = vsel %vm340, %v303, 0
    %v537 = vsel %vm340, %v304, 0
    %v540 = vsel %vm340, %v305, 0
    %v543 = vsel %vm340, %v306, 0
    %v546 = vsel %vm340, %v307, 0
    %v549 = vsel %vm340, %v308, 0
    %v552 = vsel %vm340, %v309, 0
    %v555 = vsel %vm340, %v310, 0
    %v558 = vsel %vm340, %v311, 0
    %v561 = vsel %vm340, %v312, 0
    %v564 = vsel %vm340, %v313, 0
    %v567 = vsel %vm340, %v314, 0
    %v570 = vsel %vm340, %v315, 0
    %v573 = vsel %vm340, %v316, 0
    %v576 = vsel %vm340, %v317, 0
    %v579 = vsel %vm340, %v318, 0
    %v582 = vsel %vm340, %v319, 0
    %v585 = vsel %vm340, %v320, 0
    %v588 = vsel %vm340, %v321, 0
    %v591 = vsel %vm340, %v322, 0
    %v594 = vsel %vm340, %v323, 0
    %v597 = vsel %vm340, %v324, 0
    %v600 = vsel %vm340, %v325, 0
    %v603 = vsel %vm340, %v326, 0
    %v606 = vsel %vm340, %v327, 0
    %v609 = vsel %vm340, %v328, 0
    %v612 = vsel %vm340, %v329, 0
    %v615 = vsel %vm340, %v330, 0
    %v618 = vsel %vm340, %v331, 0
    %v621 = vsel %vm340, %v332, 0
    %v624 = vsel %vm340, %v333, 0
    %v627 = vsel %vm340, %v334, 0
    %vm629 = vcmask 1043456
    %vm630 = vcmask 1044480
    %v631 = vsel %vm629, 4294967295, 65535
    %v632 = vsel %vm630, %v631, 0
    %v634 = vand.u32 %v335, %v632
    %636 = vmatpush.bf16.msra.mxu0 0
    %637 = vmatpush.bf16.msra.mxu0 0
    %638 = vmatpush.bf16.msra.mxu0 0
    %639 = vmatpush.bf16.msra.mxu0 0
    %640 = vmatpush.bf16.msra.mxu0 0
    %641 = vmatpush.bf16.msra.mxu0 0
    %642 = vmatpush.bf16.msra.mxu0 0
    %643 = vmatpush.bf16.msra.mxu0 %v634
    %644 = vmatmul.bf16.gmra.mxu0 %v342
    %v645 = vpop.f32.mrf.mxu0
    %v646 = vadd.f32 %v338, %v645
    %v647 = vpop.f32.mrf.mxu0
    %v648 = vadd.f32 %v338, %v647
    %649 = vmatmul.bf16.gmra.mxu0 %v345
    %v650 = vpop.f32.mrf.mxu0
    %v651 = vadd.f32 %v338, %v650
    %v652 = vpop.f32.mrf.mxu0
    %v653 = vadd.f32 %v338, %v652
    %654 = vmatmul.bf16.gmra.mxu0 %v348
    %v655 = vpop.f32.mrf.mxu0
    %v656 = vadd.f32 %v338, %v655
    %v657 = vpop.f32.mrf.mxu0
    %v658 = vadd.f32 %v338, %v657
    %659 = vmatmul.bf16.gmra.mxu0 %v351
    %v660 = vpop.f32.mrf.mxu0
    %v661 = vadd.f32 %v338, %v660
    %v662 = vpop.f32.mrf.mxu0
    %v663 = vadd.f32 %v338, %v662
    %664 = vmatmul.bf16.gmra.mxu0 %v354
    %v665 = vpop.f32.mrf.mxu0
    %v666 = vadd.f32 %v338, %v665
    %v667 = vpop.f32.mrf.mxu0
    %v668 = vadd.f32 %v338, %v667
    %669 = vmatmul.bf16.gmra.mxu0 %v357
    %v670 = vpop.f32.mrf.mxu0
    %v671 = vadd.f32 %v338, %v670
    %v672 = vpop.f32.mrf.mxu0
    %v673 = vadd.f32 %v338, %v672
    %674 = vmatmul.bf16.gmra.mxu0 %v360
    %v675 = vpop.f32.mrf.mxu0
    %v676 = vadd.f32 %v338, %v675
    %v677 = vpop.f32.mrf.mxu0
    %v678 = vadd.f32 %v338, %v677
    %679 = vmatmul.bf16.gmra.mxu0 %v363
    %v680 = vpop.f32.mrf.mxu0
    %v681 = vadd.f32 %v338, %v680
    %v682 = vpop.f32.mrf.mxu0
    %v683 = vadd.f32 %v338, %v682
    %684 = vmatmul.bf16.gmra.mxu0 %v366
    %v685 = vpop.f32.mrf.mxu0
    %v686 = vadd.f32 %v338, %v685
    %v687 = vpop.f32.mrf.mxu0
    %v688 = vadd.f32 %v338, %v687
    %689 = vmatmul.bf16.gmra.mxu0 %v369
    %v690 = vpop.f32.mrf.mxu0
    %v691 = vadd.f32 %v338, %v690
    %v692 = vpop.f32.mrf.mxu0
    %v693 = vadd.f32 %v338, %v692
    %694 = vmatmul.bf16.gmra.mxu0 %v372
    %v695 = vpop.f32.mrf.mxu0
    %v696 = vadd.f32 %v338, %v695
    %v697 = vpop.f32.mrf.mxu0
    %v698 = vadd.f32 %v338, %v697
    %699 = vmatmul.bf16.gmra.mxu0 %v375
    %v700 = vpop.f32.mrf.mxu0
    %v701 = vadd.f32 %v338, %v700
    %v702 = vpop.f32.mrf.mxu0
    %v703 = vadd.f32 %v338, %v702
    %704 = vmatmul.bf16.gmra.mxu0 %v378
    %v705 = vpop.f32.mrf.mxu0
    %v706 = vadd.f32 %v338, %v705
    %v707 = vpop.f32.mrf.mxu0
    %v708 = vadd.f32 %v338, %v707
    %709 = vmatmul.bf16.gmra.mxu0 %v381
    %v710 = vpop.f32.mrf.mxu0
    %v711 = vadd.f32 %v338, %v710
    %v712 = vpop.f32.mrf.mxu0
    %v713 = vadd.f32 %v338, %v712
    %714 = vmatmul.bf16.gmra.mxu0 %v384
    %v715 = vpop.f32.mrf.mxu0
    %v716 = vadd.f32 %v338, %v715
    %v717 = vpop.f32.mrf.mxu0
    %v718 = vadd.f32 %v338, %v717
    %719 = vmatmul.bf16.gmra.mxu0 %v387
    %v720 = vpop.f32.mrf.mxu0
    %v721 = vadd.f32 %v338, %v720
    %v722 = vpop.f32.mrf.mxu0
    %v723 = vadd.f32 %v338, %v722
    %724 = vmatmul.bf16.gmra.mxu0 %v390
    %v725 = vpop.f32.mrf.mxu0
    %v726 = vadd.f32 %v338, %v725
    %v727 = vpop.f32.mrf.mxu0
    %v728 = vadd.f32 %v338, %v727
    %729 = vmatmul.bf16.gmra.mxu0 %v393
    %v730 = vpop.f32.mrf.mxu0
    %v731 = vadd.f32 %v338, %v730
    %v732 = vpop.f32.mrf.mxu0
    %v733 = vadd.f32 %v338, %v732
    %734 = vmatmul.bf16.gmra.mxu0 %v396
    %v735 = vpop.f32.mrf.mxu0
    %v736 = vadd.f32 %v338, %v735
    %v737 = vpop.f32.mrf.mxu0
    %v738 = vadd.f32 %v338, %v737
    %739 = vmatmul.bf16.gmra.mxu0 %v399
    %v740 = vpop.f32.mrf.mxu0
    %v741 = vadd.f32 %v338, %v740
    %v742 = vpop.f32.mrf.mxu0
    %v743 = vadd.f32 %v338, %v742
    %744 = vmatmul.bf16.gmra.mxu0 %v402
    %v745 = vpop.f32.mrf.mxu0
    %v746 = vadd.f32 %v338, %v745
    %v747 = vpop.f32.mrf.mxu0
    %v748 = vadd.f32 %v338, %v747
    %749 = vmatmul.bf16.gmra.mxu0 %v405
    %v750 = vpop.f32.mrf.mxu0
    %v751 = vadd.f32 %v338, %v750
    %v752 = vpop.f32.mrf.mxu0
    %v753 = vadd.f32 %v338, %v752
    %754 = vmatmul.bf16.gmra.mxu0 %v408
    %v755 = vpop.f32.mrf.mxu0
    %v756 = vadd.f32 %v338, %v755
    %v757 = vpop.f32.mrf.mxu0
    %v758 = vadd.f32 %v338, %v757
    %759 = vmatmul.bf16.gmra.mxu0 %v411
    %v760 = vpop.f32.mrf.mxu0
    %v761 = vadd.f32 %v338, %v760
    %v762 = vpop.f32.mrf.mxu0
    %v763 = vadd.f32 %v338, %v762
    %764 = vmatmul.bf16.gmra.mxu0 %v414
    %v765 = vpop.f32.mrf.mxu0
    %v766 = vadd.f32 %v338, %v765
    %v767 = vpop.f32.mrf.mxu0
    %v768 = vadd.f32 %v338, %v767
    %769 = vmatmul.bf16.gmra.mxu0 %v417
    %v770 = vpop.f32.mrf.mxu0
    %v771 = vadd.f32 %v338, %v770
    %v772 = vpop.f32.mrf.mxu0
    %v773 = vadd.f32 %v338, %v772
    %774 = vmatmul.bf16.gmra.mxu0 %v420
    %v775 = vpop.f32.mrf.mxu0
    %v776 = vadd.f32 %v338, %v775
    %v777 = vpop.f32.mrf.mxu0
    %v778 = vadd.f32 %v338, %v777
    %779 = vmatmul.bf16.gmra.mxu0 %v423
    %v780 = vpop.f32.mrf.mxu0
    %v781 = vadd.f32 %v338, %v780
    %v782 = vpop.f32.mrf.mxu0
    %v783 = vadd.f32 %v338, %v782
    %784 = vmatmul.bf16.gmra.mxu0 %v426
    %v785 = vpop.f32.mrf.mxu0
    %v786 = vadd.f32 %v338, %v785
    %v787 = vpop.f32.mrf.mxu0
    %v788 = vadd.f32 %v338, %v787
    %789 = vmatmul.bf16.gmra.mxu0 %v429
    %v790 = vpop.f32.mrf.mxu0
    %v791 = vadd.f32 %v338, %v790
    %v792 = vpop.f32.mrf.mxu0
    %v793 = vadd.f32 %v338, %v792
    %794 = vmatmul.bf16.gmra.mxu0 %v432
    %v795 = vpop.f32.mrf.mxu0
    %v796 = vadd.f32 %v338, %v795
    %v797 = vpop.f32.mrf.mxu0
    %v798 = vadd.f32 %v338, %v797
    %799 = vmatmul.bf16.gmra.mxu0 %v435
    %v800 = vpop.f32.mrf.mxu0
    %v801 = vadd.f32 %v338, %v800
    %v802 = vpop.f32.mrf.mxu0
    %v803 = vadd.f32 %v338, %v802
    %804 = vmatmul.bf16.gmra.mxu0 %v438
    %v805 = vpop.f32.mrf.mxu0
    %v806 = vadd.f32 %v338, %v805
    %v807 = vpop.f32.mrf.mxu0
    %v808 = vadd.f32 %v338, %v807
    %809 = vmatmul.bf16.gmra.mxu0 %v441
    %v810 = vpop.f32.mrf.mxu0
    %v811 = vadd.f32 %v338, %v810
    %v812 = vpop.f32.mrf.mxu0
    %v813 = vadd.f32 %v338, %v812
    %814 = vmatmul.bf16.gmra.mxu0 %v444
    %v815 = vpop.f32.mrf.mxu0
    %v816 = vadd.f32 %v338, %v815
    %v817 = vpop.f32.mrf.mxu0
    %v818 = vadd.f32 %v338, %v817
    %819 = vmatmul.bf16.gmra.mxu0 %v447
    %v820 = vpop.f32.mrf.mxu0
    %v821 = vadd.f32 %v338, %v820
    %v822 = vpop.f32.mrf.mxu0
    %v823 = vadd.f32 %v338, %v822
    %824 = vmatmul.bf16.gmra.mxu0 %v450
    %v825 = vpop.f32.mrf.mxu0
    %v826 = vadd.f32 %v338, %v825
    %v827 = vpop.f32.mrf.mxu0
    %v828 = vadd.f32 %v338, %v827
    %829 = vmatmul.bf16.gmra.mxu0 %v453
    %v830 = vpop.f32.mrf.mxu0
    %v831 = vadd.f32 %v338, %v830
    %v832 = vpop.f32.mrf.mxu0
    %v833 = vadd.f32 %v338, %v832
    %834 = vmatmul.bf16.gmra.mxu0 %v456
    %v835 = vpop.f32.mrf.mxu0
    %v836 = vadd.f32 %v338, %v835
    %v837 = vpop.f32.mrf.mxu0
    %v838 = vadd.f32 %v338, %v837
    %839 = vmatmul.bf16.gmra.mxu0 %v459
    %v840 = vpop.f32.mrf.mxu0
    %v841 = vadd.f32 %v338, %v840
    %v842 = vpop.f32.mrf.mxu0
    %v843 = vadd.f32 %v338, %v842
    %844 = vmatmul.bf16.gmra.mxu0 %v462
    %v845 = vpop.f32.mrf.mxu0
    %v846 = vadd.f32 %v338, %v845
    %v847 = vpop.f32.mrf.mxu0
    %v848 = vadd.f32 %v338, %v847
    %849 = vmatmul.bf16.gmra.mxu0 %v465
    %v850 = vpop.f32.mrf.mxu0
    %v851 = vadd.f32 %v338, %v850
    %v852 = vpop.f32.mrf.mxu0
    %v853 = vadd.f32 %v338, %v852
    %854 = vmatmul.bf16.gmra.mxu0 %v468
    %v855 = vpop.f32.mrf.mxu0
    %v856 = vadd.f32 %v338, %v855
    %v857 = vpop.f32.mrf.mxu0
    %v858 = vadd.f32 %v338, %v857
    %859 = vmatmul.bf16.gmra.mxu0 %v471
    %v860 = vpop.f32.mrf.mxu0
    %v861 = vadd.f32 %v338, %v860
    %v862 = vpop.f32.mrf.mxu0
    %v863 = vadd.f32 %v338, %v862
    %864 = vmatmul.bf16.gmra.mxu0 %v474
    %v865 = vpop.f32.mrf.mxu0
    %v866 = vadd.f32 %v338, %v865
    %v867 = vpop.f32.mrf.mxu0
    %v868 = vadd.f32 %v338, %v867
    %869 = vmatmul.bf16.gmra.mxu0 %v477
    %v870 = vpop.f32.mrf.mxu0
    %v871 = vadd.f32 %v338, %v870
    %v872 = vpop.f32.mrf.mxu0
    %v873 = vadd.f32 %v338, %v872
    %874 = vmatmul.bf16.gmra.mxu0 %v480
    %v875 = vpop.f32.mrf.mxu0
    %v876 = vadd.f32 %v338, %v875
    %v877 = vpop.f32.mrf.mxu0
    %v878 = vadd.f32 %v338, %v877
    %879 = vmatmul.bf16.gmra.mxu0 %v483
    %v880 = vpop.f32.mrf.mxu0
    %v881 = vadd.f32 %v338, %v880
    %v882 = vpop.f32.mrf.mxu0
    %v883 = vadd.f32 %v338, %v882
    %884 = vmatmul.bf16.gmra.mxu0 %v486
    %v885 = vpop.f32.mrf.mxu0
    %v886 = vadd.f32 %v338, %v885
    %v887 = vpop.f32.mrf.mxu0
    %v888 = vadd.f32 %v338, %v887
    %889 = vmatmul.bf16.gmra.mxu0 %v489
    %v890 = vpop.f32.mrf.mxu0
    %v891 = vadd.f32 %v338, %v890
    %v892 = vpop.f32.mrf.mxu0
    %v893 = vadd.f32 %v338, %v892
    %894 = vmatmul.bf16.gmra.mxu0 %v492
    %v895 = vpop.f32.mrf.mxu0
    %v896 = vadd.f32 %v338, %v895
    %v897 = vpop.f32.mrf.mxu0
    %v898 = vadd.f32 %v338, %v897
    %899 = vmatmul.bf16.gmra.mxu0 %v495
    %v900 = vpop.f32.mrf.mxu0
    %v901 = vadd.f32 %v338, %v900
    %v902 = vpop.f32.mrf.mxu0
    %v903 = vadd.f32 %v338, %v902
    %904 = vmatmul.bf16.gmra.mxu0 %v498
    %v905 = vpop.f32.mrf.mxu0
    %v906 = vadd.f32 %v338, %v905
    %v907 = vpop.f32.mrf.mxu0
    %v908 = vadd.f32 %v338, %v907
    %909 = vmatmul.bf16.gmra.mxu0 %v501
    %v910 = vpop.f32.mrf.mxu0
    %v911 = vadd.f32 %v338, %v910
    %v912 = vpop.f32.mrf.mxu0
    %v913 = vadd.f32 %v338, %v912
    %914 = vmatmul.bf16.gmra.mxu0 %v504
    %v915 = vpop.f32.mrf.mxu0
    %v916 = vadd.f32 %v338, %v915
    %v917 = vpop.f32.mrf.mxu0
    %v918 = vadd.f32 %v338, %v917
    %919 = vmatmul.bf16.gmra.mxu0 %v507
    %v920 = vpop.f32.mrf.mxu0
    %v921 = vadd.f32 %v338, %v920
    %v922 = vpop.f32.mrf.mxu0
    %v923 = vadd.f32 %v338, %v922
    %924 = vmatmul.bf16.gmra.mxu0 %v510
    %v925 = vpop.f32.mrf.mxu0
    %v926 = vadd.f32 %v338, %v925
    %v927 = vpop.f32.mrf.mxu0
    %v928 = vadd.f32 %v338, %v927
    %929 = vmatmul.bf16.gmra.mxu0 %v513
    %v930 = vpop.f32.mrf.mxu0
    %v931 = vadd.f32 %v338, %v930
    %v932 = vpop.f32.mrf.mxu0
    %v933 = vadd.f32 %v338, %v932
    %934 = vmatmul.bf16.gmra.mxu0 %v516
    %v935 = vpop.f32.mrf.mxu0
    %v936 = vadd.f32 %v338, %v935
    %v937 = vpop.f32.mrf.mxu0
    %v938 = vadd.f32 %v338, %v937
    %939 = vmatmul.bf16.gmra.mxu0 %v519
    %v940 = vpop.f32.mrf.mxu0
    %v941 = vadd.f32 %v338, %v940
    %v942 = vpop.f32.mrf.mxu0
    %v943 = vadd.f32 %v338, %v942
    %944 = vmatmul.bf16.gmra.mxu0 %v522
    %v945 = vpop.f32.mrf.mxu0
    %v946 = vadd.f32 %v338, %v945
    %v947 = vpop.f32.mrf.mxu0
    %v948 = vadd.f32 %v338, %v947
    %949 = vmatmul.bf16.gmra.mxu0 %v525
    %v950 = vpop.f32.mrf.mxu0
    %v951 = vadd.f32 %v338, %v950
    %v952 = vpop.f32.mrf.mxu0
    %v953 = vadd.f32 %v338, %v952
    %954 = vmatmul.bf16.gmra.mxu0 %v528
    %v955 = vpop.f32.mrf.mxu0
    %v956 = vadd.f32 %v338, %v955
    %v957 = vpop.f32.mrf.mxu0
    %v958 = vadd.f32 %v338, %v957
    %959 = vmatmul.bf16.gmra.mxu0 %v531
    %v960 = vpop.f32.mrf.mxu0
    %v961 = vadd.f32 %v338, %v960
    %v962 = vpop.f32.mrf.mxu0
    %v963 = vadd.f32 %v338, %v962
    %964 = vmatmul.bf16.gmra.mxu0 %v534
    %v965 = vpop.f32.mrf.mxu0
    %v966 = vadd.f32 %v338, %v965
    %v967 = vpop.f32.mrf.mxu0
    %v968 = vadd.f32 %v338, %v967
    %969 = vmatmul.bf16.gmra.mxu0 %v537
    %v970 = vpop.f32.mrf.mxu0
    %v971 = vadd.f32 %v338, %v970
    %v972 = vpop.f32.mrf.mxu0
    %v973 = vadd.f32 %v338, %v972
    %974 = vmatmul.bf16.gmra.mxu0 %v540
    %v975 = vpop.f32.mrf.mxu0
    %v976 = vadd.f32 %v338, %v975
    %v977 = vpop.f32.mrf.mxu0
    %v978 = vadd.f32 %v338, %v977
    %979 = vmatmul.bf16.gmra.mxu0 %v543
    %v980 = vpop.f32.mrf.mxu0
    %v981 = vadd.f32 %v338, %v980
    %v982 = vpop.f32.mrf.mxu0
    %v983 = vadd.f32 %v338, %v982
    %984 = vmatmul.bf16.gmra.mxu0 %v546
    %v985 = vpop.f32.mrf.mxu0
    %v986 = vadd.f32 %v338, %v985
    %v987 = vpop.f32.mrf.mxu0
    %v988 = vadd.f32 %v338, %v987
    %989 = vmatmul.bf16.gmra.mxu0 %v549
    %v990 = vpop.f32.mrf.mxu0
    %v991 = vadd.f32 %v338, %v990
    %v992 = vpop.f32.mrf.mxu0
    %v993 = vadd.f32 %v338, %v992
    %994 = vmatmul.bf16.gmra.mxu0 %v552
    %v995 = vpop.f32.mrf.mxu0
    %v996 = vadd.f32 %v338, %v995
    %v997 = vpop.f32.mrf.mxu0
    %v998 = vadd.f32 %v338, %v997
    %999 = vmatmul.bf16.gmra.mxu0 %v555
    %v1000 = vpop.f32.mrf.mxu0
    %v1001 = vadd.f32 %v338, %v1000
    %v1002 = vpop.f32.mrf.mxu0
    %v1003 = vadd.f32 %v338, %v1002
    %1004 = vmatmul.bf16.gmra.mxu0 %v558
    %v1005 = vpop.f32.mrf.mxu0
    %v1006 = vadd.f32 %v338, %v1005
    %v1007 = vpop.f32.mrf.mxu0
    %v1008 = vadd.f32 %v338, %v1007
    %1009 = vmatmul.bf16.gmra.mxu0 %v561
    %v1010 = vpop.f32.mrf.mxu0
    %v1011 = vadd.f32 %v338, %v1010
    %v1012 = vpop.f32.mrf.mxu0
    %v1013 = vadd.f32 %v338, %v1012
    %1014 = vmatmul.bf16.gmra.mxu0 %v564
    %v1015 = vpop.f32.mrf.mxu0
    %v1016 = vadd.f32 %v338, %v1015
    %v1017 = vpop.f32.mrf.mxu0
    %v1018 = vadd.f32 %v338, %v1017
    %1019 = vmatmul.bf16.gmra.mxu0 %v567
    %v1020 = vpop.f32.mrf.mxu0
    %v1021 = vadd.f32 %v338, %v1020
    %v1022 = vpop.f32.mrf.mxu0
    %v1023 = vadd.f32 %v338, %v1022
    %1024 = vmatmul.bf16.gmra.mxu0 %v570
    %v1025 = vpop.f32.mrf.mxu0
    %v1026 = vadd.f32 %v338, %v1025
    %v1027 = vpop.f32.mrf.mxu0
    %v1028 = vadd.f32 %v338, %v1027
    %1029 = vmatmul.bf16.gmra.mxu0 %v573
    %v1030 = vpop.f32.mrf.mxu0
    %v1031 = vadd.f32 %v338, %v1030
    %v1032 = vpop.f32.mrf.mxu0
    %v1033 = vadd.f32 %v338, %v1032
    %1034 = vmatmul.bf16.gmra.mxu0 %v576
    %v1035 = vpop.f32.mrf.mxu0
    %v1036 = vadd.f32 %v338, %v1035
    %v1037 = vpop.f32.mrf.mxu0
    %v1038 = vadd.f32 %v338, %v1037
    %1039 = vmatmul.bf16.gmra.mxu0 %v579
    %v1040 = vpop.f32.mrf.mxu0
    %v1041 = vadd.f32 %v338, %v1040
    %v1042 = vpop.f32.mrf.mxu0
    %v1043 = vadd.f32 %v338, %v1042
    %1044 = vmatmul.bf16.gmra.mxu0 %v582
    %v1045 = vpop.f32.mrf.mxu0
    %v1046 = vadd.f32 %v338, %v1045
    %v1047 = vpop.f32.mrf.mxu0
    %v1048 = vadd.f32 %v338, %v1047
    %1049 = vmatmul.bf16.gmra.mxu0 %v585
    %v1050 = vpop.f32.mrf.mxu0
    %v1051 = vadd.f32 %v338, %v1050
    %v1052 = vpop.f32.mrf.mxu0
    %v1053 = vadd.f32 %v338, %v1052
    %1054 = vmatmul.bf16.gmra.mxu0 %v588
    %v1055 = vpop.f32.mrf.mxu0
    %v1056 = vadd.f32 %v338, %v1055
    %v1057 = vpop.f32.mrf.mxu0
    %v1058 = vadd.f32 %v338, %v1057
    %1059 = vmatmul.bf16.gmra.mxu0 %v591
    %v1060 = vpop.f32.mrf.mxu0
    %v1061 = vadd.f32 %v338, %v1060
    %v1062 = vpop.f32.mrf.mxu0
    %v1063 = vadd.f32 %v338, %v1062
    %1064 = vmatmul.bf16.gmra.mxu0 %v594
    %v1065 = vpop.f32.mrf.mxu0
    %v1066 = vadd.f32 %v338, %v1065
    %v1067 = vpop.f32.mrf.mxu0
    %v1068 = vadd.f32 %v338, %v1067
    %1069 = vmatmul.bf16.gmra.mxu0 %v597
    %v1070 = vpop.f32.mrf.mxu0
    %v1071 = vadd.f32 %v338, %v1070
    %v1072 = vpop.f32.mrf.mxu0
    %v1073 = vadd.f32 %v338, %v1072
    %1074 = vmatmul.bf16.gmra.mxu0 %v600
    %v1075 = vpop.f32.mrf.mxu0
    %v1076 = vadd.f32 %v338, %v1075
    %v1077 = vpop.f32.mrf.mxu0
    %v1078 = vadd.f32 %v338, %v1077
    %1079 = vmatmul.bf16.gmra.mxu0 %v603
    %v1080 = vpop.f32.mrf.mxu0
    %v1081 = vadd.f32 %v338, %v1080
    %v1082 = vpop.f32.mrf.mxu0
    %v1083 = vadd.f32 %v338, %v1082
    %1084 = vmatmul.bf16.gmra.mxu0 %v606
    %v1085 = vpop.f32.mrf.mxu0
    %v1086 = vadd.f32 %v338, %v1085
    %v1087 = vpop.f32.mrf.mxu0
    %v1088 = vadd.f32 %v338, %v1087
    %1089 = vmatmul.bf16.gmra.mxu0 %v609
    %v1090 = vpop.f32.mrf.mxu0
    %v1091 = vadd.f32 %v338, %v1090
    %v1092 = vpop.f32.mrf.mxu0
    %v1093 = vadd.f32 %v338, %v1092
    %1094 = vmatmul.bf16.gmra.mxu0 %v612
    %v1095 = vpop.f32.mrf.mxu0
    %v1096 = vadd.f32 %v338, %v1095
    %v1097 = vpop.f32.mrf.mxu0
    %v1098 = vadd.f32 %v338, %v1097
    %1099 = vmatmul.bf16.gmra.mxu0 %v615
    %v1100 = vpop.f32.mrf.mxu0
    %v1101 = vadd.f32 %v338, %v1100
    %v1102 = vpop.f32.mrf.mxu0
    %v1103 = vadd.f32 %v338, %v1102
    %1104 = vmatmul.bf16.gmra.mxu0 %v618
    %v1105 = vpop.f32.mrf.mxu0
    %v1106 = vadd.f32 %v338, %v1105
    %v1107 = vpop.f32.mrf.mxu0
    %v1108 = vadd.f32 %v338, %v1107
    %1109 = vmatmul.bf16.gmra.mxu0 %v621
    %v1110 = vpop.f32.mrf.mxu0
    %v1111 = vadd.f32 %v338, %v1110
    %v1112 = vpop.f32.mrf.mxu0
    %v1113 = vadd.f32 %v338, %v1112
    %1114 = vmatmul.bf16.gmra.mxu0 %v624
    %v1115 = vpop.f32.mrf.mxu0
    %v1116 = vadd.f32 %v338, %v1115
    %v1117 = vpop.f32.mrf.mxu0
    %v1118 = vadd.f32 %v338, %v1117
    %1119 = vmatmul.bf16.gmra.mxu0 %v627
    %v1120 = vpop.f32.mrf.mxu0
    %v1121 = vadd.f32 %v338, %v1120
    %v1122 = vpop.f32.mrf.mxu0
    %v1123 = vadd.f32 %v338, %v1122
    %1124 = vdwg.mxu0
    %v1125 = vmax.f32 %v646, 0.0
    %v1126 = vmax.f32 %v648, 0.0
    %v1127 = vmax.f32 %v651, 0.0
    %v1128 = vmax.f32 %v653, 0.0
    %v1129 = vmax.f32 %v656, 0.0
    %v1130 = vmax.f32 %v658, 0.0
    %v1131 = vmax.f32 %v661, 0.0
    %v1132 = vmax.f32 %v663, 0.0
    %v1133 = vmax.f32 %v666, 0.0
    %v1134 = vmax.f32 %v668, 0.0
    %v1135 = vmax.f32 %v671, 0.0
    %v1136 = vmax.f32 %v673, 0.0
    %v1137 = vmax.f32 %v676, 0.0
    %v1138 = vmax.f32 %v678, 0.0
    %v1139 = vmax.f32 %v681, 0.0
    %v1140 = vmax.f32 %v683, 0.0
    %v1141 = vmax.f32 %v686, 0.0
    %v1142 = vmax.f32 %v688, 0.0
    %v1143 = vmax.f32 %v691, 0.0
    %v1144 = vmax.f32 %v693, 0.0
    %v1145 = vmax.f32 %v696, 0.0
    %v1146 = vmax.f32 %v698, 0.0
    %v1147 = vmax.f32 %v701, 0.0
    %v1148 = vmax.f32 %v703, 0.0
    %v1149 = vmax.f32 %v706, 0.0
    %v1150 = vmax.f32 %v708, 0.0
    %v1151 = vmax.f32 %v711, 0.0
    %v1152 = vmax.f32 %v713, 0.0
    %v1153 = vmax.f32 %v716, 0.0
    %v1154 = vmax.f32 %v718, 0.0
    %v1155 = vmax.f32 %v721, 0.0
    %v1156 = vmax.f32 %v723, 0.0
    %v1157 = vmax.f32 %v726, 0.0
    %v1158 = vmax.f32 %v728, 0.0
    %v1159 = vmax.f32 %v731, 0.0
    %v1160 = vmax.f32 %v733, 0.0
    %v1161 = vmax.f32 %v736, 0.0
    %v1162 = vmax.f32 %v738, 0.0
    %v1163 = vmax.f32 %v741, 0.0
    %v1164 = vmax.f32 %v743, 0.0
    %v1165 = vmax.f32 %v746, 0.0
    %v1166 = vmax.f32 %v748, 0.0
    %v1167 = vmax.f32 %v751, 0.0
    %v1168 = vmax.f32 %v753, 0.0
    %v1169 = vmax.f32 %v756, 0.0
    %v1170 = vmax.f32 %v758, 0.0
    %v1171 = vmax.f32 %v761, 0.0
    %v1172 = vmax.f32 %v763, 0.0
    %v1173 = vmax.f32 %v766, 0.0
    %v1174 = vmax.f32 %v768, 0.0
    %v1175 = vmax.f32 %v771, 0.0
    %v1176 = vmax.f32 %v773, 0.0
    %v1177 = vmax.f32 %v776, 0.0
    %v1178 = vmax.f32 %v778, 0.0
    %v1179 = vmax.f32 %v781, 0.0
    %v1180 = vmax.f32 %v783, 0.0
    %v1181 = vmax.f32 %v786, 0.0
    %v1182 = vmax.f32 %v788, 0.0
    %v1183 = vmax.f32 %v791, 0.0
    %v1184 = vmax.f32 %v793, 0.0
    %v1185 = vmax.f32 %v796, 0.0
    %v1186 = vmax.f32 %v798, 0.0
    %v1187 = vmax.f32 %v801, 0.0
    %v1188 = vmax.f32 %v803, 0.0
    %v1189 = vmax.f32 %v806, 0.0
    %v1190 = vmax.f32 %v808, 0.0
    %v1191 = vmax.f32 %v811, 0.0
    %v1192 = vmax.f32 %v813, 0.0
    %v1193 = vmax.f32 %v816, 0.0
    %v1194 = vmax.f32 %v818, 0.0
    %v1195 = vmax.f32 %v821, 0.0
    %v1196 = vmax.f32 %v823, 0.0
    %v1197 = vmax.f32 %v826, 0.0
    %v1198 = vmax.f32 %v828, 0.0
    %v1199 = vmax.f32 %v831, 0.0
    %v1200 = vmax.f32 %v833, 0.0
    %v1201 = vmax.f32 %v836, 0.0
    %v1202 = vmax.f32 %v838, 0.0
    %v1203 = vmax.f32 %v841, 0.0
    %v1204 = vmax.f32 %v843, 0.0
    %v1205 = vmax.f32 %v846, 0.0
    %v1206 = vmax.f32 %v848, 0.0
    %v1207 = vmax.f32 %v851, 0.0
    %v1208 = vmax.f32 %v853, 0.0
    %v1209 = vmax.f32 %v856, 0.0
    %v1210 = vmax.f32 %v858, 0.0
    %v1211 = vmax.f32 %v861, 0.0
    %v1212 = vmax.f32 %v863, 0.0
    %v1213 = vmax.f32 %v866, 0.0
    %v1214 = vmax.f32 %v868, 0.0
    %v1215 = vmax.f32 %v871, 0.0
    %v1216 = vmax.f32 %v873, 0.0
    %v1217 = vmax.f32 %v876, 0.0
    %v1218 = vmax.f32 %v878, 0.0
    %v1219 = vmax.f32 %v881, 0.0
    %v1220 = vmax.f32 %v883, 0.0
    %v1221 = vmax.f32 %v886, 0.0
    %v1222 = vmax.f32 %v888, 0.0
    %v1223 = vmax.f32 %v891, 0.0
    %v1224 = vmax.f32 %v893, 0.0
    %v1225 = vmax.f32 %v896, 0.0
    %v1226 = vmax.f32 %v898, 0.0
    %v1227 = vmax.f32 %v901, 0.0
    %v1228 = vmax.f32 %v903, 0.0
    %v1229 = vmax.f32 %v906, 0.0
    %v1230 = vmax.f32 %v908, 0.0
    %v1231 = vmax.f32 %v911, 0.0
    %v1232 = vmax.f32 %v913, 0.0
    %v1233 = vmax.f32 %v916, 0.0
    %v1234 = vmax.f32 %v918, 0.0
    %v1235 = vmax.f32 %v921, 0.0
    %v1236 = vmax.f32 %v923, 0.0
    %v1237 = vmax.f32 %v926, 0.0
    %v1238 = vmax.f32 %v928, 0.0
    %v1239 = vmax.f32 %v931, 0.0
    %v1240 = vmax.f32 %v933, 0.0
    %v1241 = vmax.f32 %v936, 0.0
    %v1242 = vmax.f32 %v938, 0.0
    %v1243 = vmax.f32 %v941, 0.0
    %v1244 = vmax.f32 %v943, 0.0
    %v1245 = vmax.f32 %v946, 0.0
    %v1246 = vmax.f32 %v948, 0.0
    %v1247 = vmax.f32 %v951, 0.0
    %v1248 = vmax.f32 %v953, 0.0
    %v1249 = vmax.f32 %v956, 0.0
    %v1250 = vmax.f32 %v958, 0.0
    %v1251 = vmax.f32 %v961, 0.0
    %v1252 = vmax.f32 %v963, 0.0
    %v1253 = vmax.f32 %v966, 0.0
    %v1254 = vmax.f32 %v968, 0.0
    %v1255 = vmax.f32 %v971, 0.0
    %v1256 = vmax.f32 %v973, 0.0
    %v1257 = vmax.f32 %v976, 0.0
    %v1258 = vmax.f32 %v978, 0.0
    %v1259 = vmax.f32 %v981, 0.0
    %v1260 = vmax.f32 %v983, 0.0
    %v1261 = vmax.f32 %v986, 0.0
    %v1262 = vmax.f32 %v988, 0.0
    %v1263 = vmax.f32 %v991, 0.0
    %v1264 = vmax.f32 %v993, 0.0
    %v1265 = vmax.f32 %v996, 0.0
    %v1266 = vmax.f32 %v998, 0.0
    %v1267 = vmax.f32 %v1001, 0.0
    %v1268 = vmax.f32 %v1003, 0.0
    %v1269 = vmax.f32 %v1006, 0.0
    %v1270 = vmax.f32 %v1008, 0.0
    %v1271 = vmax.f32 %v1011, 0.0
    %v1272 = vmax.f32 %v1013, 0.0
    %v1273 = vmax.f32 %v1016, 0.0
    %v1274 = vmax.f32 %v1018, 0.0
    %v1275 = vmax.f32 %v1021, 0.0
    %v1276 = vmax.f32 %v1023, 0.0
    %v1277 = vmax.f32 %v1026, 0.0
    %v1278 = vmax.f32 %v1028, 0.0
    %v1279 = vmax.f32 %v1031, 0.0
    %v1280 = vmax.f32 %v1033, 0.0
    %v1281 = vmax.f32 %v1036, 0.0
    %v1282 = vmax.f32 %v1038, 0.0
    %v1283 = vmax.f32 %v1041, 0.0
    %v1284 = vmax.f32 %v1043, 0.0
    %v1285 = vmax.f32 %v1046, 0.0
    %v1286 = vmax.f32 %v1048, 0.0
    %v1287 = vmax.f32 %v1051, 0.0
    %v1288 = vmax.f32 %v1053, 0.0
    %v1289 = vmax.f32 %v1056, 0.0
    %v1290 = vmax.f32 %v1058, 0.0
    %v1291 = vmax.f32 %v1061, 0.0
    %v1292 = vmax.f32 %v1063, 0.0
    %v1293 = vmax.f32 %v1066, 0.0
    %v1294 = vmax.f32 %v1068, 0.0
    %v1295 = vmax.f32 %v1071, 0.0
    %v1296 = vmax.f32 %v1073, 0.0
    %v1297 = vmax.f32 %v1076, 0.0
    %v1298 = vmax.f32 %v1078, 0.0
    %v1299 = vmax.f32 %v1081, 0.0
    %v1300 = vmax.f32 %v1083, 0.0
    %v1301 = vmax.f32 %v1086, 0.0
    %v1302 = vmax.f32 %v1088, 0.0
    %v1303 = vmax.f32 %v1091, 0.0
    %v1304 = vmax.f32 %v1093, 0.0
    %v1305 = vmax.f32 %v1096, 0.0
    %v1306 = vmax.f32 %v1098, 0.0
    %v1307 = vmax.f32 %v1101, 0.0
    %v1308 = vmax.f32 %v1103, 0.0
    %v1309 = vmax.f32 %v1106, 0.0
    %v1310 = vmax.f32 %v1108, 0.0
    %v1311 = vmax.f32 %v1111, 0.0
    %v1312 = vmax.f32 %v1113, 0.0
    %v1313 = vmax.f32 %v1116, 0.0
    %v1314 = vmax.f32 %v1118, 0.0
    %v1315 = vmax.f32 %v1121, 0.0
    %v1316 = vmax.f32 %v1123, 0.0
    %v1317 = vld [vmem:[%s3] sm:$0x3f]
    %v1318 = vld [vmem:[%s3 + $0x8] sm:$0x3f]
    %v1319 = vld [vmem:[%s3 + $0x10] sm:$0x3f]
    %v1320 = vld [vmem:[%s3 + $0x18] sm:$0x3f]
    %v1321 = vld [vmem:[%s3 + $0x20] sm:$0x3f]
    %v1322 = vld [vmem:[%s3 + $0x28] sm:$0x3f]
    %v1323 = vld [vmem:[%s3 + $0x30] sm:$0x3f]
    %v1324 = vld [vmem:[%s3 + $0x38] sm:$0x3f]
    %v1325 = vld [vmem:[%s3 + $0x40] sm:$0x3f]
    %v1326 = vld [vmem:[%s3 + $0x48] sm:$0x3f]
    %v1327 = vld [vmem:[%s3 + $0x50] sm:$0x3f]
    %v1328 = vld [vmem:[%s3 + $0x58] sm:$0x3f]
    %v1329 = vpack.c.bf16 %v1317, %v1317
    %v1330 = vpack.c.bf16 %v1318, %v1318
    %v1331 = vpack.c.bf16 %v1319, %v1319
    %v1332 = vpack.c.bf16 %v1320, %v1320
    %v1333 = vpack.c.bf16 %v1321, %v1321
    %v1334 = vpack.c.bf16 %v1322, %v1322
    %v1335 = vpack.c.bf16 %v1323, %v1323
    %v1336 = vpack.c.bf16 %v1324, %v1324
    %v1337 = vpack.c.bf16 %v1325, %v1325
    %v1338 = vpack.c.bf16 %v1326, %v1326
    %v1339 = vpack.c.bf16 %v1327, %v1327
    %v1340 = vpack.c.bf16 %v1328, %v1328
    %v1341 = vpack.c.bf16 %v1126, %v1125
    %v1342 = vpack.c.bf16 %v1128, %v1127
    %v1343 = vpack.c.bf16 %v1130, %v1129
    %v1344 = vpack.c.bf16 %v1132, %v1131
    %v1345 = vpack.c.bf16 %v1134, %v1133
    %v1346 = vpack.c.bf16 %v1136, %v1135
    %v1347 = vpack.c.bf16 %v1138, %v1137
    %v1348 = vpack.c.bf16 %v1140, %v1139
    %v1349 = vpack.c.bf16 %v1142, %v1141
    %v1350 = vpack.c.bf16 %v1144, %v1143
    %v1351 = vpack.c.bf16 %v1146, %v1145
    %v1352 = vpack.c.bf16 %v1148, %v1147
    %v1353 = vpack.c.bf16 %v1150, %v1149
    %v1354 = vpack.c.bf16 %v1152, %v1151
    %v1355 = vpack.c.bf16 %v1154, %v1153
    %v1356 = vpack.c.bf16 %v1156, %v1155
    %v1357 = vpack.c.bf16 %v1158, %v1157
    %v1358 = vpack.c.bf16 %v1160, %v1159
    %v1359 = vpack.c.bf16 %v1162, %v1161
    %v1360 = vpack.c.bf16 %v1164, %v1163
    %v1361 = vpack.c.bf16 %v1166, %v1165
    %v1362 = vpack.c.bf16 %v1168, %v1167
    %v1363 = vpack.c.bf16 %v1170, %v1169
    %v1364 = vpack.c.bf16 %v1172, %v1171
    %v1365 = vpack.c.bf16 %v1174, %v1173
    %v1366 = vpack.c.bf16 %v1176, %v1175
    %v1367 = vpack.c.bf16 %v1178, %v1177
    %v1368 = vpack.c.bf16 %v1180, %v1179
    %v1369 = vpack.c.bf16 %v1182, %v1181
    %v1370 = vpack.c.bf16 %v1184, %v1183
    %v1371 = vpack.c.bf16 %v1186, %v1185
    %v1372 = vpack.c.bf16 %v1188, %v1187
    %v1373 = vpack.c.bf16 %v1190, %v1189
    %v1374 = vpack.c.bf16 %v1192, %v1191
    %v1375 = vpack.c.bf16 %v1194, %v1193
    %v1376 = vpack.c.bf16 %v1196, %v1195
    %v1377 = vpack.c.bf16 %v1198, %v1197
    %v1378 = vpack.c.bf16 %v1200, %v1199
    %v1379 = vpack.c.bf16 %v1202, %v1201
    %v1380 = vpack.c.bf16 %v1204, %v1203
    %v1381 = vpack.c.bf16 %v1206, %v1205
    %v1382 = vpack.c.bf16 %v1208, %v1207
    %v1383 = vpack.c.bf16 %v1210, %v1209
    %v1384 = vpack.c.bf16 %v1212, %v1211
    %v1385 = vpack.c.bf16 %v1214, %v1213
    %v1386 = vpack.c.bf16 %v1216, %v1215
    %v1387 = vpack.c.bf16 %v1218, %v1217
    %v1388 = vpack.c.bf16 %v1220, %v1219
    %v1389 = vpack.c.bf16 %v1222, %v1221
    %v1390 = vpack.c.bf16 %v1224, %v1223
    %v1391 = vpack.c.bf16 %v1226, %v1225
    %v1392 = vpack.c.bf16 %v1228, %v1227
    %v1393 = vpack.c.bf16 %v1230, %v1229
    %v1394 = vpack.c.bf16 %v1232, %v1231
    %v1395 = vpack.c.bf16 %v1234, %v1233
    %v1396 = vpack.c.bf16 %v1236, %v1235
    %v1397 = vpack.c.bf16 %v1238, %v1237
    %v1398 = vpack.c.bf16 %v1240, %v1239
    %v1399 = vpack.c.bf16 %v1242, %v1241
    %v1400 = vpack.c.bf16 %v1244, %v1243
    %v1401 = vpack.c.bf16 %v1246, %v1245
    %v1402 = vpack.c.bf16 %v1248, %v1247
    %v1403 = vpack.c.bf16 %v1250, %v1249
    %v1404 = vpack.c.bf16 %v1252, %v1251
    %v1405 = vpack.c.bf16 %v1254, %v1253
    %v1406 = vpack.c.bf16 %v1256, %v1255
    %v1407 = vpack.c.bf16 %v1258, %v1257
    %v1408 = vpack.c.bf16 %v1260, %v1259
    %v1409 = vpack.c.bf16 %v1262, %v1261
    %v1410 = vpack.c.bf16 %v1264, %v1263
    %v1411 = vpack.c.bf16 %v1266, %v1265
    %v1412 = vpack.c.bf16 %v1268, %v1267
    %v1413 = vpack.c.bf16 %v1270, %v1269
    %v1414 = vpack.c.bf16 %v1272, %v1271
    %v1415 = vpack.c.bf16 %v1274, %v1273
    %v1416 = vpack.c.bf16 %v1276, %v1275
    %v1417 = vpack.c.bf16 %v1278, %v1277
    %v1418 = vpack.c.bf16 %v1280, %v1279
    %v1419 = vpack.c.bf16 %v1282, %v1281
    %v1420 = vpack.c.bf16 %v1284, %v1283
    %v1421 = vpack.c.bf16 %v1286, %v1285
    %v1422 = vpack.c.bf16 %v1288, %v1287
    %v1423 = vpack.c.bf16 %v1290, %v1289
    %v1424 = vpack.c.bf16 %v1292, %v1291
    %v1425 = vpack.c.bf16 %v1294, %v1293
    %v1426 = vpack.c.bf16 %v1296, %v1295
    %v1427 = vpack.c.bf16 %v1298, %v1297
    %v1428 = vpack.c.bf16 %v1300, %v1299
    %v1429 = vpack.c.bf16 %v1302, %v1301
    %v1430 = vpack.c.bf16 %v1304, %v1303
    %v1431 = vpack.c.bf16 %v1306, %v1305
    %v1432 = vpack.c.bf16 %v1308, %v1307
    %v1433 = vpack.c.bf16 %v1310, %v1309
    %v1434 = vpack.c.bf16 %v1312, %v1311
    %v1435 = vpack.c.bf16 %v1314, %v1313
    %v1436 = vpack.c.bf16 %v1316, %v1315
    %1437 = vmatpush.bf16.msra.mxu0 %v1348
    %1438 = vmatpush.bf16.msra.mxu0 %v1347
    %1439 = vmatpush.bf16.msra.mxu0 %v1346
    %1440 = vmatpush.bf16.msra.mxu0 %v1345
    %1441 = vmatpush.bf16.msra.mxu0 %v1344
    %1442 = vmatpush.bf16.msra.mxu0 %v1343
    %1443 = vmatpush.bf16.msra.mxu0 %v1342
    %1444 = vmatpush.bf16.msra.mxu0 %v1341
    %1445 = vmatmul.bf16.gmra.mxu0 %v1329
    %v1446 = vpop.f32.mrf.mxu0
    %v1447 = vadd.f32 0.0, %v1446
    %v1448 = vpop.f32.mrf.mxu0
    %1449 = vdwg.mxu0
    %1450 = vmatpush.bf16.msra.mxu0 %v1356
    %1451 = vmatpush.bf16.msra.mxu0 %v1355
    %1452 = vmatpush.bf16.msra.mxu0 %v1354
    %1453 = vmatpush.bf16.msra.mxu0 %v1353
    %1454 = vmatpush.bf16.msra.mxu0 %v1352
    %1455 = vmatpush.bf16.msra.mxu0 %v1351
    %1456 = vmatpush.bf16.msra.mxu0 %v1350
    %1457 = vmatpush.bf16.msra.mxu0 %v1349
    %1458 = vmatmul.bf16.gmra.mxu0 %v1330
    %v1459 = vpop.f32.mrf.mxu0
    %v1460 = vadd.f32 %v1447, %v1459
    %v1461 = vpop.f32.mrf.mxu0
    %1462 = vdwg.mxu0
    %1463 = vmatpush.bf16.msra.mxu0 %v1364
    %1464 = vmatpush.bf16.msra.mxu0 %v1363
    %1465 = vmatpush.bf16.msra.mxu0 %v1362
    %1466 = vmatpush.bf16.msra.mxu0 %v1361
    %1467 = vmatpush.bf16.msra.mxu0 %v1360
    %1468 = vmatpush.bf16.msra.mxu0 %v1359
    %1469 = vmatpush.bf16.msra.mxu0 %v1358
    %1470 = vmatpush.bf16.msra.mxu0 %v1357
    %1471 = vmatmul.bf16.gmra.mxu0 %v1331
    %v1472 = vpop.f32.mrf.mxu0
    %v1473 = vadd.f32 %v1460, %v1472
    %v1474 = vpop.f32.mrf.mxu0
    %1475 = vdwg.mxu0
    %1476 = vmatpush.bf16.msra.mxu0 %v1372
    %1477 = vmatpush.bf16.msra.mxu0 %v1371
    %1478 = vmatpush.bf16.msra.mxu0 %v1370
    %1479 = vmatpush.bf16.msra.mxu0 %v1369
    %1480 = vmatpush.bf16.msra.mxu0 %v1368
    %1481 = vmatpush.bf16.msra.mxu0 %v1367
    %1482 = vmatpush.bf16.msra.mxu0 %v1366
    %1483 = vmatpush.bf16.msra.mxu0 %v1365
    %1484 = vmatmul.bf16.gmra.mxu0 %v1332
    %v1485 = vpop.f32.mrf.mxu0
    %v1486 = vadd.f32 %v1473, %v1485
    %v1487 = vpop.f32.mrf.mxu0
    %1488 = vdwg.mxu0
    %1489 = vmatpush.bf16.msra.mxu0 %v1380
    %1490 = vmatpush.bf16.msra.mxu0 %v1379
    %1491 = vmatpush.bf16.msra.mxu0 %v1378
    %1492 = vmatpush.bf16.msra.mxu0 %v1377
    %1493 = vmatpush.bf16.msra.mxu0 %v1376
    %1494 = vmatpush.bf16.msra.mxu0 %v1375
    %1495 = vmatpush.bf16.msra.mxu0 %v1374
    %1496 = vmatpush.bf16.msra.mxu0 %v1373
    %1497 = vmatmul.bf16.gmra.mxu0 %v1333
    %v1498 = vpop.f32.mrf.mxu0
    %v1499 = vadd.f32 %v1486, %v1498
    %v1500 = vpop.f32.mrf.mxu0
    %1501 = vdwg.mxu0
    %1502 = vmatpush.bf16.msra.mxu0 %v1388
    %1503 = vmatpush.bf16.msra.mxu0 %v1387
    %1504 = vmatpush.bf16.msra.mxu0 %v1386
    %1505 = vmatpush.bf16.msra.mxu0 %v1385
    %1506 = vmatpush.bf16.msra.mxu0 %v1384
    %1507 = vmatpush.bf16.msra.mxu0 %v1383
    %1508 = vmatpush.bf16.msra.mxu0 %v1382
    %1509 = vmatpush.bf16.msra.mxu0 %v1381
    %1510 = vmatmul.bf16.gmra.mxu0 %v1334
    %v1511 = vpop.f32.mrf.mxu0
    %v1512 = vadd.f32 %v1499, %v1511
    %v1513 = vpop.f32.mrf.mxu0
    %1514 = vdwg.mxu0
    %1515 = vmatpush.bf16.msra.mxu0 %v1396
    %1516 = vmatpush.bf16.msra.mxu0 %v1395
    %1517 = vmatpush.bf16.msra.mxu0 %v1394
    %1518 = vmatpush.bf16.msra.mxu0 %v1393
    %1519 = vmatpush.bf16.msra.mxu0 %v1392
    %1520 = vmatpush.bf16.msra.mxu0 %v1391
    %1521 = vmatpush.bf16.msra.mxu0 %v1390
    %1522 = vmatpush.bf16.msra.mxu0 %v1389
    %1523 = vmatmul.bf16.gmra.mxu0 %v1335
    %v1524 = vpop.f32.mrf.mxu0
    %v1525 = vadd.f32 %v1512, %v1524
    %v1526 = vpop.f32.mrf.mxu0
    %1527 = vdwg.mxu0
    %1528 = vmatpush.bf16.msra.mxu0 %v1404
    %1529 = vmatpush.bf16.msra.mxu0 %v1403
    %1530 = vmatpush.bf16.msra.mxu0 %v1402
    %1531 = vmatpush.bf16.msra.mxu0 %v1401
    %1532 = vmatpush.bf16.msra.mxu0 %v1400
    %1533 = vmatpush.bf16.msra.mxu0 %v1399
    %1534 = vmatpush.bf16.msra.mxu0 %v1398
    %1535 = vmatpush.bf16.msra.mxu0 %v1397
    %1536 = vmatmul.bf16.gmra.mxu0 %v1336
    %v1537 = vpop.f32.mrf.mxu0
    %v1538 = vadd.f32 %v1525, %v1537
    %v1539 = vpop.f32.mrf.mxu0
    %1540 = vdwg.mxu0
    %1541 = vmatpush.bf16.msra.mxu0 %v1412
    %1542 = vmatpush.bf16.msra.mxu0 %v1411
    %1543 = vmatpush.bf16.msra.mxu0 %v1410
    %1544 = vmatpush.bf16.msra.mxu0 %v1409
    %1545 = vmatpush.bf16.msra.mxu0 %v1408
    %1546 = vmatpush.bf16.msra.mxu0 %v1407
    %1547 = vmatpush.bf16.msra.mxu0 %v1406
    %1548 = vmatpush.bf16.msra.mxu0 %v1405
    %1549 = vmatmul.bf16.gmra.mxu0 %v1337
    %v1550 = vpop.f32.mrf.mxu0
    %v1551 = vadd.f32 %v1538, %v1550
    %v1552 = vpop.f32.mrf.mxu0
    %1553 = vdwg.mxu0
    %1554 = vmatpush.bf16.msra.mxu0 %v1420
    %1555 = vmatpush.bf16.msra.mxu0 %v1419
    %1556 = vmatpush.bf16.msra.mxu0 %v1418
    %1557 = vmatpush.bf16.msra.mxu0 %v1417
    %1558 = vmatpush.bf16.msra.mxu0 %v1416
    %1559 = vmatpush.bf16.msra.mxu0 %v1415
    %1560 = vmatpush.bf16.msra.mxu0 %v1414
    %1561 = vmatpush.bf16.msra.mxu0 %v1413
    %1562 = vmatmul.bf16.gmra.mxu0 %v1338
    %v1563 = vpop.f32.mrf.mxu0
    %v1564 = vadd.f32 %v1551, %v1563
    %v1565 = vpop.f32.mrf.mxu0
    %1566 = vdwg.mxu0
    %1567 = vmatpush.bf16.msra.mxu0 %v1428
    %1568 = vmatpush.bf16.msra.mxu0 %v1427
    %1569 = vmatpush.bf16.msra.mxu0 %v1426
    %1570 = vmatpush.bf16.msra.mxu0 %v1425
    %1571 = vmatpush.bf16.msra.mxu0 %v1424
    %1572 = vmatpush.bf16.msra.mxu0 %v1423
    %1573 = vmatpush.bf16.msra.mxu0 %v1422
    %1574 = vmatpush.bf16.msra.mxu0 %v1421
    %1575 = vmatmul.bf16.gmra.mxu0 %v1339
    %v1576 = vpop.f32.mrf.mxu0
    %v1577 = vadd.f32 %v1564, %v1576
    %v1578 = vpop.f32.mrf.mxu0
    %1579 = vdwg.mxu0
    %1580 = vmatpush.bf16.msra.mxu0 %v1436
    %1581 = vmatpush.bf16.msra.mxu0 %v1435
    %1582 = vmatpush.bf16.msra.mxu0 %v1434
    %1583 = vmatpush.bf16.msra.mxu0 %v1433
    %1584 = vmatpush.bf16.msra.mxu0 %v1432
    %1585 = vmatpush.bf16.msra.mxu0 %v1431
    %1586 = vmatpush.bf16.msra.mxu0 %v1430
    %1587 = vmatpush.bf16.msra.mxu0 %v1429
    %1588 = vmatmul.bf16.gmra.mxu0 %v1340
    %v1589 = vpop.f32.mrf.mxu0
    %v1590 = vadd.f32 %v1577, %v1589
    %v1591 = vpop.f32.mrf.mxu0
    %1592 = vdwg.mxu0
    %v1593 = vld [vmem:[%s4] sm:$0x3f]
    %v1594 = vld [vmem:[%s5] sm:$0xff]
    %v1595 = vld [vmem:[%s5 + $0x8] sm:$0xff]
    %v1596 = vld [vmem:[%s5 + $0x10] sm:$0xff]
    %v1597 = vpack.c.bf16 %v1593, %v1593
    %v1598 = vpack.c.bf16 %v1595, %v1594
    %v1599 = vpack.c.bf16 %v1596, %v1596
    %v1600 = vld [vmem:[%s6] sm:$0x1]
    %v1602 = vperm.slane %v1600, 0
    %vm1604 = vcmask 195584
    %v1606 = vsel %vm1604, %v1597, 0
    %v1609 = vsel %vm629, %v1599, 0
    %1611 = vmatpush.bf16.msra.mxu0 0
    %1612 = vmatpush.bf16.msra.mxu0 0
    %1613 = vmatpush.bf16.msra.mxu0 0
    %1614 = vmatpush.bf16.msra.mxu0 0
    %1615 = vmatpush.bf16.msra.mxu0 0
    %1616 = vmatpush.bf16.msra.mxu0 0
    %1617 = vmatpush.bf16.msra.mxu0 %v1609
    %1618 = vmatpush.bf16.msra.mxu0 %v1598
    %1619 = vmatmul.bf16.gmra.mxu0 %v1606
    %v1620 = vpop.f32.mrf.mxu0
    %v1621 = vadd.f32 %v1602, %v1620
    %v1622 = vpop.f32.mrf.mxu0
    %1623 = vdwg.mxu0
    %1625 = vrot.lane.b32.xlu0 %v1621, 32
    %v1626 = vpop.permute.xlu0 %1625
    %vm1628 = vcmask 261120
    %v1629 = vsel %vm1628, %v1590, %v1626
    %vm1630 = vcmask 1045504
    %v1631 = vsel %vm1630, %v1629, 0.0
    %v1632 = vld [vmem:[%s7] sm:$0xff]
    %v1633 = vld [vmem:[%s7 + $0x8] sm:$0xff]
    %v1634 = vld [vmem:[%s7 + $0x10] sm:$0xff]
    %v1635 = vld [vmem:[%s7 + $0x18] sm:$0xff]
    %v1636 = vld [vmem:[%s7 + $0x20] sm:$0xff]
    %v1637 = vld [vmem:[%s7 + $0x28] sm:$0xff]
    %v1638 = vld [vmem:[%s7 + $0x30] sm:$0xff]
    %v1639 = vld [vmem:[%s7 + $0x38] sm:$0xff]
    %v1640 = vld [vmem:[%s7 + $0x40] sm:$0xff]
    %v1641 = vld [vmem:[%s7 + $0x48] sm:$0xff]
    %v1642 = vld [vmem:[%s7 + $0x50] sm:$0xff]
    %v1643 = vld [vmem:[%s7 + $0x58] sm:$0xff]
    %v1644 = vld [vmem:[%s7 + $0x60] sm:$0xff]
    %v1645 = vld [vmem:[%s7 + $0x68] sm:$0xff]
    %v1646 = vld [vmem:[%s7 + $0x70] sm:$0xff]
    %v1647 = vld [vmem:[%s7 + $0x78] sm:$0xff]
    %v1648 = vpack.c.bf16 %v1631, %v1631
    %v1649 = vpack.c.bf16 %v1634, %v1632
    %v1650 = vpack.c.bf16 %v1635, %v1633
    %v1651 = vpack.c.bf16 %v1638, %v1636
    %v1652 = vpack.c.bf16 %v1639, %v1637
    %v1653 = vpack.c.bf16 %v1642, %v1640
    %v1654 = vpack.c.bf16 %v1643, %v1641
    %v1655 = vpack.c.bf16 %v1646, %v1644
    %v1656 = vpack.c.bf16 %v1647, %v1645
    %v1657 = vld [vmem:[%s8] sm:$0x3]
    %v1659 = vperm.slane %v1657, 0
    %v1660 = vperm.slane %v1657, 1
    %vm1663 = vcmask 523264
    %v1665 = vsel %vm1663, %v1648, 0
    %1667 = vmatpush.bf16.msra.mxu0 0
    %1668 = vmatpush.bf16.msra.mxu0 0
    %1669 = vmatpush.bf16.msra.mxu0 0
    %1670 = vmatpush.bf16.msra.mxu0 0
    %1671 = vmatpush.bf16.msra.mxu0 %v1655
    %1672 = vmatpush.bf16.msra.mxu0 %v1653
    %1673 = vmatpush.bf16.msra.mxu0 %v1651
    %1674 = vmatpush.bf16.msra.mxu0 %v1649
    %1675 = vmatmul.bf16.gmra.mxu0 %v1665
    %v1676 = vpop.f32.mrf.mxu0
    %v1677 = vadd.f32 %v1659, %v1676
    %v1678 = vpop.f32.mrf.mxu0
    %1679 = vdwg.mxu0
    %1680 = vmatpush.bf16.msra.mxu0 0
    %1681 = vmatpush.bf16.msra.mxu0 0
    %1682 = vmatpush.bf16.msra.mxu0 0
    %1683 = vmatpush.bf16.msra.mxu0 0
    %1684 = vmatpush.bf16.msra.mxu0 %v1656
    %1685 = vmatpush.bf16.msra.mxu0 %v1654
    %1686 = vmatpush.bf16.msra.mxu0 %v1652
    %1687 = vmatpush.bf16.msra.mxu0 %v1650
    %1688 = vmatmul.bf16.gmra.mxu0 %v1665
    %v1689 = vpop.f32.mrf.mxu0
    %v1690 = vadd.f32 %v1660, %v1689
    %v1691 = vpop.f32.mrf.mxu0
    %1692 = vdwg.mxu0
    %v1693 = vld [vmem:[%s9] sm:$0xff]
    %v1694 = vld [vmem:[%s9 + $0x8] sm:$0xff]
    %v1695 = vld [vmem:[%s9 + $0x10] sm:$0xff]
    %v1696 = vld [vmem:[%s9 + $0x18] sm:$0xff]
    %v1697 = vld [vmem:[%s9 + $0x20] sm:$0xff]
    %v1698 = vld [vmem:[%s9 + $0x28] sm:$0xff]
    %v1699 = vld [vmem:[%s9 + $0x30] sm:$0xff]
    %v1700 = vld [vmem:[%s9 + $0x38] sm:$0xff]
    %v1701 = vpack.c.bf16 %v1695, %v1693
    %v1702 = vpack.c.bf16 %v1696, %v1694
    %v1703 = vpack.c.bf16 %v1699, %v1697
    %v1704 = vpack.c.bf16 %v1700, %v1698
    %v1706 = vsel %vm1628, 0, 0
    %1708 = vmatpush.bf16.msra.mxu0 0
    %1709 = vmatpush.bf16.msra.mxu0 0
    %1710 = vmatpush.bf16.msra.mxu0 0
    %1711 = vmatpush.bf16.msra.mxu0 0
    %1712 = vmatpush.bf16.msra.mxu0 0
    %1713 = vmatpush.bf16.msra.mxu0 0
    %1714 = vmatpush.bf16.msra.mxu0 %v1703
    %1715 = vmatpush.bf16.msra.mxu0 %v1701
    %1716 = vmatmul.bf16.gmra.mxu0 %v1706
    %v1717 = vpop.f32.mrf.mxu0
    %v1718 = vadd.f32 0.0, %v1717
    %v1719 = vpop.f32.mrf.mxu0
    %1720 = vdwg.mxu0
    %1721 = vmatpush.bf16.msra.mxu0 0
    %1722 = vmatpush.bf16.msra.mxu0 0
    %1723 = vmatpush.bf16.msra.mxu0 0
    %1724 = vmatpush.bf16.msra.mxu0 0
    %1725 = vmatpush.bf16.msra.mxu0 0
    %1726 = vmatpush.bf16.msra.mxu0 0
    %1727 = vmatpush.bf16.msra.mxu0 %v1704
    %1728 = vmatpush.bf16.msra.mxu0 %v1702
    %1729 = vmatmul.bf16.gmra.mxu0 %v1706
    %v1730 = vpop.f32.mrf.mxu0
    %v1731 = vadd.f32 0.0, %v1730
    %v1732 = vpop.f32.mrf.mxu0
    %1733 = vdwg.mxu0
    %v1734 = vadd.f32 %v1677, %v1718
    %v1736 = vrot.slane %v1731, 2
    %v1738 = vadd.f32 %v1690, %v1736
    %v1740 = vrot.slane %v1738, 6
    %vm1742 = vcmask 1040384
    %v1743 = vsel %vm1742, %v1734, %v1740
    %v1744 = vxor.u32 %v1743, 2147483648
    %v1745 = vmul.f32 %v1744, 1.442695
    %v1746 = vpow.pop %v1745
    %v1747 = vadd.f32 %v1746, 1.0
    %v1748 = vrcp.pop %v1747
    %v1749 = vmul.f32 %v1747, %v1748
    %v1750 = vsub.f32 1.0, %v1749
    %v1751 = vmul.f32 %v1748, %v1750
    %v1752 = vadd.f32 %v1748, %v1751
    %vm1753 = vweird.f32 %v1747
    %vm1754 = vweird.f32 %v1748
    %vm1755 = vmor %vm1753, %vm1754
    %v1756 = vsel %vm1755, %v1748, %v1752
    %v1757 = vand.u32 2147483647, %v1747
    %vm1758 = vcmp.eq.f32.partialorder %v1757, 8.507059e+37
    %v1759 = vand.u32 %v1747, 2147483648
    %v1760 = vor.u32 1.1754944e-38, %v1759
    %v1761 = vsel %vm1758, %v1760, %v1756
    %v1762 = vmul.f32 1.0, %v1761
    %v1763 = vtanh.pop %v1743
    %v1764 = vmul.f32 %v1762, 0.0
    %1766 = vrot.lane.b32.xlu0 %v1763, 64
    %v1767 = vpop.permute.xlu0 %1766
    %v1769 = vmul.f32 %v1762, %v1767
    %1771 = vrot.lane.b32.xlu0 %v1769, 32
    %v1772 = vpop.permute.xlu0 %1771
    %v1774 = vadd.f32 %v1764, %v1772
    %v1775 = vtanh.pop %v1774
    %1777 = vrot.lane.b32.xlu0 %v1775, 64
    %v1778 = vpop.permute.xlu0 %1777
    %v1780 = vmul.f32 %v1762, %v1778
    %1782 = vrot.lane.b32.xlu0 %v1780, 32
    %v1783 = vpop.permute.xlu0 %1782
    %vm1785 = vcmask 253952
    %1786 = vst.msk [vmem:[#allocation2] sm:$0x1] %vm1785, %v1783
    %1787 = vrot.lane.b32.xlu0 %v1780, 64
    %v1788 = vpop.permute.xlu0 %1787
    %vm1790 = vcmask 517377
    %1791 = vst.msk [vmem:[#allocation2 + $0x6] sm:$0x2] %vm1790, %v1788
    %v1792 = vpack.c.bf16 %v1780, %v1780
    %1794 = vrot.lane.b32.xlu0 %v1792, 32
    %v1795 = vpop.permute.xlu0 %1794
    %v1797 = vsel %vm1628, %v1795, 0
    %1799 = vmatpush.bf16.msra.mxu0 0
    %1800 = vmatpush.bf16.msra.mxu0 0
    %1801 = vmatpush.bf16.msra.mxu0 0
    %1802 = vmatpush.bf16.msra.mxu0 0
    %1803 = vmatpush.bf16.msra.mxu0 0
    %1804 = vmatpush.bf16.msra.mxu0 0
    %1805 = vmatpush.bf16.msra.mxu0 %v1703
    %1806 = vmatpush.bf16.msra.mxu0 %v1701
    %1807 = vmatmul.bf16.gmra.mxu0 %v1797
    %v1808 = vpop.f32.mrf.mxu0
    %v1809 = vadd.f32 0.0, %v1808
    %v1810 = vpop.f32.mrf.mxu0
    %1811 = vdwg.mxu0
    %1812 = vmatpush.bf16.msra.mxu0 0
    %1813 = vmatpush.bf16.msra.mxu0 0
    %1814 = vmatpush.bf16.msra.mxu0 0
    %1815 = vmatpush.bf16.msra.mxu0 0
    %1816 = vmatpush.bf16.msra.mxu0 0
    %1817 = vmatpush.bf16.msra.mxu0 0
    %1818 = vmatpush.bf16.msra.mxu0 %v1704
    %1819 = vmatpush.bf16.msra.mxu0 %v1702
    %1820 = vmatmul.bf16.gmra.mxu0 %v1797
    %v1821 = vpop.f32.mrf.mxu0
    %v1822 = vadd.f32 0.0, %v1821
    %v1823 = vpop.f32.mrf.mxu0
    %1824 = vdwg.mxu0
    %v1826 = vrot.slane %v1809, 7
    %v1828 = vadd.f32 %v1677, %v1826
    %v1830 = vrot.slane %v1822, 3
    %v1832 = vadd.f32 %v1690, %v1830
    %v1834 = vrot.slane %v1828, 1
    %v1837 = vrot.slane %v1832, 5
    %v1839 = vsel %vm1742, %v1834, %v1837
    %v1840 = vxor.u32 %v1839, 2147483648
    %v1841 = vmul.f32 %v1840, 1.442695
    %v1842 = vpow.pop %v1841
    %v1843 = vadd.f32 %v1842, 1.0
    %v1844 = vrcp.pop %v1843
    %v1845 = vmul.f32 %v1843, %v1844
    %v1846 = vsub.f32 1.0, %v1845
    %v1847 = vmul.f32 %v1844, %v1846
    %v1848 = vadd.f32 %v1844, %v1847
    %vm1849 = vweird.f32 %v1843
    %vm1850 = vweird.f32 %v1844
    %vm1851 = vmor %vm1849, %vm1850
    %v1852 = vsel %vm1851, %v1844, %v1848
    %v1853 = vand.u32 2147483647, %v1843
    %vm1854 = vcmp.eq.f32.partialorder %v1853, 8.507059e+37
    %v1855 = vand.u32 %v1843, 2147483648
    %v1856 = vor.u32 1.1754944e-38, %v1855
    %v1857 = vsel %vm1854, %v1856, %v1852
    %v1858 = vmul.f32 1.0, %v1857
    %v1859 = vtanh.pop %v1839
    %v1860 = vmul.f32 %v1858, %v1774
    %1862 = vrot.lane.b32.xlu0 %v1859, 64
    %v1863 = vpop.permute.xlu0 %1862
    %v1865 = vmul.f32 %v1858, %v1863
    %1867 = vrot.lane.b32.xlu0 %v1865, 32
    %v1868 = vpop.permute.xlu0 %1867
    %v1870 = vadd.f32 %v1860, %v1868
    %v1871 = vtanh.pop %v1870
    %1873 = vrot.lane.b32.xlu0 %v1871, 64
    %v1874 = vpop.permute.xlu0 %1873
    %v1876 = vmul.f32 %v1858, %v1874
    %1878 = vrot.lane.b32.xlu0 %v1876, 32
    %v1879 = vpop.permute.xlu0 %1878
    %1881 = vst.msk [vmem:[#allocation2 + $0x1] sm:$0x1] %vm1785, %v1879
    %1882 = vrot.lane.b32.xlu0 %v1876, 64
    %v1883 = vpop.permute.xlu0 %1882
    %1885 = vst.msk [vmem:[#allocation2 + $0x5] sm:$0x2] %vm1790, %v1883
    %v1886 = vpack.c.bf16 %v1876, %v1876
    %1888 = vrot.lane.b32.xlu0 %v1886, 32
    %v1889 = vpop.permute.xlu0 %1888
    %v1891 = vsel %vm1628, %v1889, 0
    %1893 = vmatpush.bf16.msra.mxu0 0
    %1894 = vmatpush.bf16.msra.mxu0 0
    %1895 = vmatpush.bf16.msra.mxu0 0
    %1896 = vmatpush.bf16.msra.mxu0 0
    %1897 = vmatpush.bf16.msra.mxu0 0
    %1898 = vmatpush.bf16.msra.mxu0 0
    %1899 = vmatpush.bf16.msra.mxu0 %v1703
    %1900 = vmatpush.bf16.msra.mxu0 %v1701
    %1901 = vmatmul.bf16.gmra.mxu0 %v1891
    %v1902 = vpop.f32.mrf.mxu0
    %v1903 = vadd.f32 0.0, %v1902
    %v1904 = vpop.f32.mrf.mxu0
    %1905 = vdwg.mxu0
    %1906 = vmatpush.bf16.msra.mxu0 0
    %1907 = vmatpush.bf16.msra.mxu0 0
    %1908 = vmatpush.bf16.msra.mxu0 0
    %1909 = vmatpush.bf16.msra.mxu0 0
    %1910 = vmatpush.bf16.msra.mxu0 0
    %1911 = vmatpush.bf16.msra.mxu0 0
    %1912 = vmatpush.bf16.msra.mxu0 %v1704
    %1913 = vmatpush.bf16.msra.mxu0 %v1702
    %1914 = vmatmul.bf16.gmra.mxu0 %v1891
    %v1915 = vpop.f32.mrf.mxu0
    %v1916 = vadd.f32 0.0, %v1915
    %v1917 = vpop.f32.mrf.mxu0
    %1918 = vdwg.mxu0
    %v1920 = vrot.slane %v1903, 6
    %v1922 = vadd.f32 %v1677, %v1920
    %v1924 = vrot.slane %v1916, 4
    %v1926 = vadd.f32 %v1690, %v1924
    %v1928 = vrot.slane %v1922, 2
    %v1931 = vrot.slane %v1926, 4
    %v1933 = vsel %vm1742, %v1928, %v1931
    %v1934 = vxor.u32 %v1933, 2147483648
    %v1935 = vmul.f32 %v1934, 1.442695
    %v1936 = vpow.pop %v1935
    %v1937 = vadd.f32 %v1936, 1.0
    %v1938 = vrcp.pop %v1937
    %v1939 = vmul.f32 %v1937, %v1938
    %v1940 = vsub.f32 1.0, %v1939
    %v1941 = vmul.f32 %v1938, %v1940
    %v1942 = vadd.f32 %v1938, %v1941
    %vm1943 = vweird.f32 %v1937
    %vm1944 = vweird.f32 %v1938
    %vm1945 = vmor %vm1943, %vm1944
    %v1946 = vsel %vm1945, %v1938, %v1942
    %v1947 = vand.u32 2147483647, %v1937
    %vm1948 = vcmp.eq.f32.partialorder %v1947, 8.507059e+37
    %v1949 = vand.u32 %v1937, 2147483648
    %v1950 = vor.u32 1.1754944e-38, %v1949
    %v1951 = vsel %vm1948, %v1950, %v1946
    %v1952 = vmul.f32 1.0, %v1951
    %v1953 = vtanh.pop %v1933
    %v1954 = vmul.f32 %v1952, %v1870
    %1956 = vrot.lane.b32.xlu0 %v1953, 64
    %v1957 = vpop.permute.xlu0 %1956
    %v1959 = vmul.f32 %v1952, %v1957
    %1961 = vrot.lane.b32.xlu0 %v1959, 32
    %v1962 = vpop.permute.xlu0 %1961
    %v1964 = vadd.f32 %v1954, %v1962
    %v1965 = vtanh.pop %v1964
    %1967 = vrot.lane.b32.xlu0 %v1965, 64
    %v1968 = vpop.permute.xlu0 %1967
    %v1970 = vmul.f32 %v1952, %v1968
    %1972 = vrot.lane.b32.xlu0 %v1970, 32
    %v1973 = vpop.permute.xlu0 %1972
    %1975 = vst.msk [vmem:[#allocation2 + $0x2] sm:$0x1] %vm1785, %v1973
    %1976 = vrot.lane.b32.xlu0 %v1970, 64
    %v1977 = vpop.permute.xlu0 %1976
    %1979 = vst.msk [vmem:[#allocation2 + $0x4] sm:$0x2] %vm1790, %v1977
    %v1980 = vpack.c.bf16 %v1970, %v1970
    %1982 = vrot.lane.b32.xlu0 %v1980, 32
    %v1983 = vpop.permute.xlu0 %1982
    %v1985 = vsel %vm1628, %v1983, 0
    %1987 = vmatpush.bf16.msra.mxu0 0
    %1988 = vmatpush.bf16.msra.mxu0 0
    %1989 = vmatpush.bf16.msra.mxu0 0
    %1990 = vmatpush.bf16.msra.mxu0 0
    %1991 = vmatpush.bf16.msra.mxu0 0
    %1992 = vmatpush.bf16.msra.mxu0 0
    %1993 = vmatpush.bf16.msra.mxu0 %v1703
    %1994 = vmatpush.bf16.msra.mxu0 %v1701
    %1995 = vmatmul.bf16.gmra.mxu0 %v1985
    %v1996 = vpop.f32.mrf.mxu0
    %v1997 = vadd.f32 0.0, %v1996
    %v1998 = vpop.f32.mrf.mxu0
    %1999 = vdwg.mxu0
    %2000 = vmatpush.bf16.msra.mxu0 0
    %2001 = vmatpush.bf16.msra.mxu0 0
    %2002 = vmatpush.bf16.msra.mxu0 0
    %2003 = vmatpush.bf16.msra.mxu0 0
    %2004 = vmatpush.bf16.msra.mxu0 0
    %2005 = vmatpush.bf16.msra.mxu0 0
    %2006 = vmatpush.bf16.msra.mxu0 %v1704
    %2007 = vmatpush.bf16.msra.mxu0 %v1702
    %2008 = vmatmul.bf16.gmra.mxu0 %v1985
    %v2009 = vpop.f32.mrf.mxu0
    %v2010 = vadd.f32 0.0, %v2009
    %v2011 = vpop.f32.mrf.mxu0
    %2012 = vdwg.mxu0
    %v2014 = vrot.slane %v1997, 5
    %v2016 = vadd.f32 %v1677, %v2014
    %v2018 = vrot.slane %v2010, 5
    %v2020 = vadd.f32 %v1690, %v2018
    %v2022 = vrot.slane %v2016, 3
    %v2025 = vrot.slane %v2020, 3
    %v2027 = vsel %vm1742, %v2022, %v2025
    %v2028 = vxor.u32 %v2027, 2147483648
    %v2029 = vmul.f32 %v2028, 1.442695
    %v2030 = vpow.pop %v2029
    %v2031 = vadd.f32 %v2030, 1.0
    %v2032 = vrcp.pop %v2031
    %v2033 = vmul.f32 %v2031, %v2032
    %v2034 = vsub.f32 1.0, %v2033
    %v2035 = vmul.f32 %v2032, %v2034
    %v2036 = vadd.f32 %v2032, %v2035
    %vm2037 = vweird.f32 %v2031
    %vm2038 = vweird.f32 %v2032
    %vm2039 = vmor %vm2037, %vm2038
    %v2040 = vsel %vm2039, %v2032, %v2036
    %v2041 = vand.u32 2147483647, %v2031
    %vm2042 = vcmp.eq.f32.partialorder %v2041, 8.507059e+37
    %v2043 = vand.u32 %v2031, 2147483648
    %v2044 = vor.u32 1.1754944e-38, %v2043
    %v2045 = vsel %vm2042, %v2044, %v2040
    %v2046 = vmul.f32 1.0, %v2045
    %v2047 = vtanh.pop %v2027
    %v2048 = vmul.f32 %v2046, %v1964
    %2050 = vrot.lane.b32.xlu0 %v2047, 64
    %v2051 = vpop.permute.xlu0 %2050
    %v2053 = vmul.f32 %v2046, %v2051
    %2055 = vrot.lane.b32.xlu0 %v2053, 32
    %v2056 = vpop.permute.xlu0 %2055
    %v2058 = vadd.f32 %v2048, %v2056
    %v2059 = vtanh.pop %v2058
    %2061 = vrot.lane.b32.xlu0 %v2059, 64
    %v2062 = vpop.permute.xlu0 %2061
    %v2064 = vmul.f32 %v2046, %v2062
    %2066 = vrot.lane.b32.xlu0 %v2064, 32
    %v2067 = vpop.permute.xlu0 %2066
    %2069 = vst.msk [vmem:[#allocation2 + $0x3] sm:$0x1] %vm1785, %v2067
    %2070 = vrot.lane.b32.xlu0 %v2064, 64
    %v2071 = vpop.permute.xlu0 %2070
    %2073 = vst.msk [vmem:[#allocation2 + $0x3] sm:$0x2] %vm1790, %v2071
    %v2074 = vpack.c.bf16 %v2064, %v2064
    %2076 = vrot.lane.b32.xlu0 %v2074, 32
    %v2077 = vpop.permute.xlu0 %2076
    %v2079 = vsel %vm1628, %v2077, 0
    %2081 = vmatpush.bf16.msra.mxu0 0
    %2082 = vmatpush.bf16.msra.mxu0 0
    %2083 = vmatpush.bf16.msra.mxu0 0
    %2084 = vmatpush.bf16.msra.mxu0 0
    %2085 = vmatpush.bf16.msra.mxu0 0
    %2086 = vmatpush.bf16.msra.mxu0 0
    %2087 = vmatpush.bf16.msra.mxu0 %v1703
    %2088 = vmatpush.bf16.msra.mxu0 %v1701
    %2089 = vmatmul.bf16.gmra.mxu0 %v2079
    %v2090 = vpop.f32.mrf.mxu0
    %v2091 = vadd.f32 0.0, %v2090
    %v2092 = vpop.f32.mrf.mxu0
    %2093 = vdwg.mxu0
    %2094 = vmatpush.bf16.msra.mxu0 0
    %2095 = vmatpush.bf16.msra.mxu0 0
    %2096 = vmatpush.bf16.msra.mxu0 0
    %2097 = vmatpush.bf16.msra.mxu0 0
    %2098 = vmatpush.bf16.msra.mxu0 0
    %2099 = vmatpush.bf16.msra.mxu0 0
    %2100 = vmatpush.bf16.msra.mxu0 %v1704
    %2101 = vmatpush.bf16.msra.mxu0 %v1702
    %2102 = vmatmul.bf16.gmra.mxu0 %v2079
    %v2103 = vpop.f32.mrf.mxu0
    %v2104 = vadd.f32 0.0, %v2103
    %v2105 = vpop.f32.mrf.mxu0
    %2106 = vdwg.mxu0
    %v2108 = vrot.slane %v2091, 4
    %v2110 = vadd.f32 %v1677, %v2108
    %v2112 = vrot.slane %v2104, 6
    %v2114 = vadd.f32 %v1690, %v2112
    %v2116 = vrot.slane %v2110, 4
    %v2119 = vrot.slane %v2114, 2
    %v2121 = vsel %vm1742, %v2116, %v2119
    %v2122 = vxor.u32 %v2121, 2147483648
    %v2123 = vmul.f32 %v2122, 1.442695
    %v2124 = vpow.pop %v2123
    %v2125 = vadd.f32 %v2124, 1.0
    %v2126 = vrcp.pop %v2125
    %v2127 = vmul.f32 %v2125, %v2126
    %v2128 = vsub.f32 1.0, %v2127
    %v2129 = vmul.f32 %v2126, %v2128
    %v2130 = vadd.f32 %v2126, %v2129
    %vm2131 = vweird.f32 %v2125
    %vm2132 = vweird.f32 %v2126
    %vm2133 = vmor %vm2131, %vm2132
    %v2134 = vsel %vm2133, %v2126, %v2130
    %v2135 = vand.u32 2147483647, %v2125
    %vm2136 = vcmp.eq.f32.partialorder %v2135, 8.507059e+37
    %v2137 = vand.u32 %v2125, 2147483648
    %v2138 = vor.u32 1.1754944e-38, %v2137
    %v2139 = vsel %vm2136, %v2138, %v2134
    %v2140 = vmul.f32 1.0, %v2139
    %v2141 = vtanh.pop %v2121
    %v2142 = vmul.f32 %v2140, %v2058
    %2144 = vrot.lane.b32.xlu0 %v2141, 64
    %v2145 = vpop.permute.xlu0 %2144
    %v2147 = vmul.f32 %v2140, %v2145
    %2149 = vrot.lane.b32.xlu0 %v2147, 32
    %v2150 = vpop.permute.xlu0 %2149
    %v2152 = vadd.f32 %v2142, %v2150
    %v2153 = vtanh.pop %v2152
    %2155 = vrot.lane.b32.xlu0 %v2153, 64
    %v2156 = vpop.permute.xlu0 %2155
    %v2158 = vmul.f32 %v2140, %v2156
    %2160 = vrot.lane.b32.xlu0 %v2158, 32
    %v2161 = vpop.permute.xlu0 %2160
    %2163 = vst.msk [vmem:[#allocation2 + $0x4] sm:$0x1] %vm1785, %v2161
    %2164 = vrot.lane.b32.xlu0 %v2158, 64
    %v2165 = vpop.permute.xlu0 %2164
    %2167 = vst.msk [vmem:[#allocation2 + $0x2] sm:$0x2] %vm1790, %v2165
    %v2168 = vpack.c.bf16 %v2158, %v2158
    %2170 = vrot.lane.b32.xlu0 %v2168, 32
    %v2171 = vpop.permute.xlu0 %2170
    %v2173 = vsel %vm1628, %v2171, 0
    %2175 = vmatpush.bf16.msra.mxu0 0
    %2176 = vmatpush.bf16.msra.mxu0 0
    %2177 = vmatpush.bf16.msra.mxu0 0
    %2178 = vmatpush.bf16.msra.mxu0 0
    %2179 = vmatpush.bf16.msra.mxu0 0
    %2180 = vmatpush.bf16.msra.mxu0 0
    %2181 = vmatpush.bf16.msra.mxu0 %v1703
    %2182 = vmatpush.bf16.msra.mxu0 %v1701
    %2183 = vmatmul.bf16.gmra.mxu0 %v2173
    %v2184 = vpop.f32.mrf.mxu0
    %v2185 = vadd.f32 0.0, %v2184
    %v2186 = vpop.f32.mrf.mxu0
    %2187 = vdwg.mxu0
    %2188 = vmatpush.bf16.msra.mxu0 0
    %2189 = vmatpush.bf16.msra.mxu0 0
    %2190 = vmatpush.bf16.msra.mxu0 0
    %2191 = vmatpush.bf16.msra.mxu0 0
    %2192 = vmatpush.bf16.msra.mxu0 0
    %2193 = vmatpush.bf16.msra.mxu0 0
    %2194 = vmatpush.bf16.msra.mxu0 %v1704
    %2195 = vmatpush.bf16.msra.mxu0 %v1702
    %2196 = vmatmul.bf16.gmra.mxu0 %v2173
    %v2197 = vpop.f32.mrf.mxu0
    %v2198 = vadd.f32 0.0, %v2197
    %v2199 = vpop.f32.mrf.mxu0
    %2200 = vdwg.mxu0
    %v2202 = vrot.slane %v2185, 3
    %v2204 = vadd.f32 %v1677, %v2202
    %v2206 = vrot.slane %v2198, 7
    %v2208 = vadd.f32 %v1690, %v2206
    %v2210 = vrot.slane %v2204, 5
    %v2213 = vrot.slane %v2208, 1
    %v2215 = vsel %vm1742, %v2210, %v2213
    %v2216 = vxor.u32 %v2215, 2147483648
    %v2217 = vmul.f32 %v2216, 1.442695
    %v2218 = vpow.pop %v2217
    %v2219 = vadd.f32 %v2218, 1.0
    %v2220 = vrcp.pop %v2219
    %v2221 = vmul.f32 %v2219, %v2220
    %v2222 = vsub.f32 1.0, %v2221
    %v2223 = vmul.f32 %v2220, %v2222
    %v2224 = vadd.f32 %v2220, %v2223
    %vm2225 = vweird.f32 %v2219
    %vm2226 = vweird.f32 %v2220
    %vm2227 = vmor %vm2225, %vm2226
    %v2228 = vsel %vm2227, %v2220, %v2224
    %v2229 = vand.u32 2147483647, %v2219
    %vm2230 = vcmp.eq.f32.partialorder %v2229, 8.507059e+37
    %v2231 = vand.u32 %v2219, 2147483648
    %v2232 = vor.u32 1.1754944e-38, %v2231
    %v2233 = vsel %vm2230, %v2232, %v2228
    %v2234 = vmul.f32 1.0, %v2233
    %v2235 = vtanh.pop %v2215
    %v2236 = vmul.f32 %v2234, %v2152
    %2238 = vrot.lane.b32.xlu0 %v2235, 64
    %v2239 = vpop.permute.xlu0 %2238
    %v2241 = vmul.f32 %v2234, %v2239
    %2243 = vrot.lane.b32.xlu0 %v2241, 32
    %v2244 = vpop.permute.xlu0 %2243
    %v2246 = vadd.f32 %v2236, %v2244
    %v2247 = vtanh.pop %v2246
    %2249 = vrot.lane.b32.xlu0 %v2247, 64
    %v2250 = vpop.permute.xlu0 %2249
    %v2252 = vmul.f32 %v2234, %v2250
    %2254 = vrot.lane.b32.xlu0 %v2252, 32
    %v2255 = vpop.permute.xlu0 %2254
    %2257 = vst.msk [vmem:[#allocation2 + $0x5] sm:$0x1] %vm1785, %v2255
    %2258 = vrot.lane.b32.xlu0 %v2252, 64
    %v2259 = vpop.permute.xlu0 %2258
    %2261 = vst.msk [vmem:[#allocation2 + $0x1] sm:$0x2] %vm1790, %v2259
    %v2262 = vpack.c.bf16 %v2252, %v2252
    %2264 = vrot.lane.b32.xlu0 %v2262, 32
    %v2265 = vpop.permute.xlu0 %2264
    %v2267 = vsel %vm1628, %v2265, 0
    %2269 = vmatpush.bf16.msra.mxu0 0
    %2270 = vmatpush.bf16.msra.mxu0 0
    %2271 = vmatpush.bf16.msra.mxu0 0
    %2272 = vmatpush.bf16.msra.mxu0 0
    %2273 = vmatpush.bf16.msra.mxu0 0
    %2274 = vmatpush.bf16.msra.mxu0 0
    %2275 = vmatpush.bf16.msra.mxu0 %v1703
    %2276 = vmatpush.bf16.msra.mxu0 %v1701
    %2277 = vmatmul.bf16.gmra.mxu0 %v2267
    %v2278 = vpop.f32.mrf.mxu0
    %v2279 = vadd.f32 0.0, %v2278
    %v2280 = vpop.f32.mrf.mxu0
    %2281 = vdwg.mxu0
    %2282 = vmatpush.bf16.msra.mxu0 0
    %2283 = vmatpush.bf16.msra.mxu0 0
    %2284 = vmatpush.bf16.msra.mxu0 0
    %2285 = vmatpush.bf16.msra.mxu0 0
    %2286 = vmatpush.bf16.msra.mxu0 0
    %2287 = vmatpush.bf16.msra.mxu0 0
    %2288 = vmatpush.bf16.msra.mxu0 %v1704
    %2289 = vmatpush.bf16.msra.mxu0 %v1702
    %2290 = vmatmul.bf16.gmra.mxu0 %v2267
    %v2291 = vpop.f32.mrf.mxu0
    %v2292 = vadd.f32 0.0, %v2291
    %v2293 = vpop.f32.mrf.mxu0
    %2294 = vdwg.mxu0
    %v2296 = vrot.slane %v2279, 2
    %v2298 = vadd.f32 %v1677, %v2296
    %v2299 = vadd.f32 %v1690, %v2292
    %v2301 = vrot.slane %v2298, 6
    %v2303 = vsel %vm1742, %v2301, %v2299
    %v2304 = vxor.u32 %v2303, 2147483648
    %v2305 = vmul.f32 %v2304, 1.442695
    %v2306 = vpow.pop %v2305
    %v2307 = vadd.f32 %v2306, 1.0
    %v2308 = vrcp.pop %v2307
    %v2309 = vmul.f32 %v2307, %v2308
    %v2310 = vsub.f32 1.0, %v2309
    %v2311 = vmul.f32 %v2308, %v2310
    %v2312 = vadd.f32 %v2308, %v2311
    %vm2313 = vweird.f32 %v2307
    %vm2314 = vweird.f32 %v2308
    %vm2315 = vmor %vm2313, %vm2314
    %v2316 = vsel %vm2315, %v2308, %v2312
    %v2317 = vand.u32 2147483647, %v2307
    %vm2318 = vcmp.eq.f32.partialorder %v2317, 8.507059e+37
    %v2319 = vand.u32 %v2307, 2147483648
    %v2320 = vor.u32 1.1754944e-38, %v2319
    %v2321 = vsel %vm2318, %v2320, %v2316
    %v2322 = vmul.f32 1.0, %v2321
    %v2323 = vtanh.pop %v2303
    %v2324 = vmul.f32 %v2322, %v2246
    %2326 = vrot.lane.b32.xlu0 %v2323, 64
    %v2327 = vpop.permute.xlu0 %2326
    %v2329 = vmul.f32 %v2322, %v2327
    %2331 = vrot.lane.b32.xlu0 %v2329, 32
    %v2332 = vpop.permute.xlu0 %2331
    %v2334 = vadd.f32 %v2324, %v2332
    %v2335 = vtanh.pop %v2334
    %2337 = vrot.lane.b32.xlu0 %v2335, 64
    %v2338 = vpop.permute.xlu0 %2337
    %v2340 = vmul.f32 %v2322, %v2338
    %2342 = vrot.lane.b32.xlu0 %v2340, 32
    %v2343 = vpop.permute.xlu0 %2342
    %2345 = vst.msk [vmem:[#allocation2 + $0x6] sm:$0x1] %vm1785, %v2343
    %2346 = vrot.lane.b32.xlu0 %v2340, 64
    %v2347 = vpop.permute.xlu0 %2346
    %2349 = vst.msk [vmem:[#allocation2] sm:$0x2] %vm1790, %v2347
    %v2350 = vpack.c.bf16 %v2340, %v2340
    %2352 = vrot.lane.b32.xlu0 %v2350, 32
    %v2353 = vpop.permute.xlu0 %2352
    %v2355 = vsel %vm1628, %v2353, 0
    %2357 = vmatpush.bf16.msra.mxu0 0
    %2358 = vmatpush.bf16.msra.mxu0 0
    %2359 = vmatpush.bf16.msra.mxu0 0
    %2360 = vmatpush.bf16.msra.mxu0 0
    %2361 = vmatpush.bf16.msra.mxu0 0
    %2362 = vmatpush.bf16.msra.mxu0 0
    %2363 = vmatpush.bf16.msra.mxu0 %v1703
    %2364 = vmatpush.bf16.msra.mxu0 %v1701
    %2365 = vmatmul.bf16.gmra.mxu0 %v2355
    %v2366 = vpop.f32.mrf.mxu0
    %v2367 = vadd.f32 0.0, %v2366
    %v2368 = vpop.f32.mrf.mxu0
    %2369 = vdwg.mxu0
    %2370 = vmatpush.bf16.msra.mxu0 0
    %2371 = vmatpush.bf16.msra.mxu0 0
    %2372 = vmatpush.bf16.msra.mxu0 0
    %2373 = vmatpush.bf16.msra.mxu0 0
    %2374 = vmatpush.bf16.msra.mxu0 0
    %2375 = vmatpush.bf16.msra.mxu0 0
    %2376 = vmatpush.bf16.msra.mxu0 %v1704
    %2377 = vmatpush.bf16.msra.mxu0 %v1702
    %2378 = vmatmul.bf16.gmra.mxu0 %v2355
    %v2379 = vpop.f32.mrf.mxu0
    %v2380 = vadd.f32 0.0, %v2379
    %v2381 = vpop.f32.mrf.mxu0
    %2382 = vdwg.mxu0
    %v2384 = vrot.slane %v2367, 1
    %v2386 = vadd.f32 %v1677, %v2384
    %v2388 = vrot.slane %v2380, 1
    %v2390 = vadd.f32 %v1690, %v2388
    %v2392 = vrot.slane %v2386, 7
    %v2395 = vrot.slane %v2390, 7
    %v2397 = vsel %vm1742, %v2392, %v2395
    %v2398 = vxor.u32 %v2397, 2147483648
    %v2399 = vmul.f32 %v2398, 1.442695
    %v2400 = vpow.pop %v2399
    %v2401 = vadd.f32 %v2400, 1.0
    %v2402 = vrcp.pop %v2401
    %v2403 = vmul.f32 %v2401, %v2402
    %v2404 = vsub.f32 1.0, %v2403
    %v2405 = vmul.f32 %v2402, %v2404
    %v2406 = vadd.f32 %v2402, %v2405
    %vm2407 = vweird.f32 %v2401
    %vm2408 = vweird.f32 %v2402
    %vm2409 = vmor %vm2407, %vm2408
    %v2410 = vsel %vm2409, %v2402, %v2406
    %v2411 = vand.u32 2147483647, %v2401
    %vm2412 = vcmp.eq.f32.partialorder %v2411, 8.507059e+37
    %v2413 = vand.u32 %v2401, 2147483648
    %v2414 = vor.u32 1.1754944e-38, %v2413
    %v2415 = vsel %vm2412, %v2414, %v2410
    %v2416 = vmul.f32 1.0, %v2415
    %v2417 = vtanh.pop %v2397
    %v2418 = vmul.f32 %v2416, %v2334
    %2420 = vrot.lane.b32.xlu0 %v2417, 64
    %v2421 = vpop.permute.xlu0 %2420
    %v2423 = vmul.f32 %v2416, %v2421
    %2425 = vrot.lane.b32.xlu0 %v2423, 32
    %v2426 = vpop.permute.xlu0 %2425
    %v2428 = vadd.f32 %v2418, %v2426
    %v2429 = vtanh.pop %v2428
    %2431 = vrot.lane.b32.xlu0 %v2429, 64
    %v2432 = vpop.permute.xlu0 %2431
    %v2434 = vmul.f32 %v2416, %v2432
    %2436 = vrot.lane.b32.xlu0 %v2434, 32
    %v2437 = vpop.permute.xlu0 %2436
    %2439 = vst.msk [vmem:[#allocation2 + $0x7] sm:$0x1] %vm1785, %v2437
    %2440 = vrot.lane.b32.xlu0 %v2434, 64
    %v2441 = vpop.permute.xlu0 %2440
    %2443 = vst.msk [vmem:[#allocation2 - $0x1] sm:$0x2] %vm1790, %v2441
    %v2444 = vld [vmem:[#allocation2] sm:$0xff]
    %v2445 = vld [vmem:[%s10] sm:$0xff]
    %v2446 = vld [vmem:[%s10 + $0x8] sm:$0xff]
    %v2447 = vld [vmem:[%s10 + $0x10] sm:$0xff]
    %v2448 = vld [vmem:[%s10 + $0x18] sm:$0xff]
    %v2449 = vld [vmem:[%s10 + $0x20] sm:$0xff]
    %v2450 = vld [vmem:[%s10 + $0x28] sm:$0xff]
    %v2451 = vld [vmem:[%s10 + $0x30] sm:$0xff]
    %v2452 = vld [vmem:[%s10 + $0x38] sm:$0xff]
    %v2453 = vpack.c.bf16 %v2444, %v2444
    %v2454 = vpack.c.bf16 %v2446, %v2445
    %v2455 = vpack.c.bf16 %v2448, %v2447
    %v2456 = vpack.c.bf16 %v2450, %v2449
    %v2457 = vpack.c.bf16 %v2452, %v2451
    %v2458 = vld [vmem:[%s11] sm:$0x1]
    %v2460 = vperm.slane %v2458, 0
    %v2463 = vsel %vm1663, %v2453, 0
    %2465 = vmatpush.bf16.msra.mxu0 0
    %2466 = vmatpush.bf16.msra.mxu0 0
    %2467 = vmatpush.bf16.msra.mxu0 0
    %2468 = vmatpush.bf16.msra.mxu0 0
    %2469 = vmatpush.bf16.msra.mxu0 %v2457
    %2470 = vmatpush.bf16.msra.mxu0 %v2456
    %2471 = vmatpush.bf16.msra.mxu0 %v2455
    %2472 = vmatpush.bf16.msra.mxu0 %v2454
    %2473 = vmatmul.bf16.gmra.mxu0 %v2463
    %v2474 = vpop.f32.mrf.mxu0
    %v2475 = vadd.f32 %v2460, %v2474
    %v2476 = vpop.f32.mrf.mxu0
    %2477 = vdwg.mxu0
    %vm2478 = vcmask 56320
    %2479 = vst.msk [vmem:[#allocation3] sm:$0xff] %vm2478, %v2475
    %2481 = vrot.lane.b32.xlu0 %v2475, 121
    %v2482 = vpop.permute.xlu0 %2481
    %vm2484 = vcmask 23552
    %2485 = vst.msk [vmem:[%s13] sm:$0xff] %vm2484, %v2482
    // Predicated region
    $region50: #{multimodal_forward.1} parent=1 // pred_check
      _
    $region51: #{multimodal_forward.1} parent=1 // pred_check_branch
      %2487 = sbr.rel (0) target = $region53
    $region52: #{multimodal_forward.1} parent=1 // pred_region
      %2489 = vsyncadd [#allocation4], 0
      %s2491 = sshll.u32 [#allocation3], 4
      %s2492 = int_to_ptr.vmem [resolvable:$true] %s2491
      %s2493 = sshll.u32 %s12, 4
      %s2494 = int_to_ptr.hbm [resolvable:$true] %s2493
      %2496 = dma.vmem_to_hbm [thread:$0]  %s2492, 128, %s2494, [#allocation4]
    $region53: #{multimodal_forward.1} parent=1 // pred_fallthru
      _
    // Predicated region
    $region54: #{multimodal_forward.1} parent=1 // pred_check
      _
    $region55: #{multimodal_forward.1} parent=1 // pred_check_branch
      %2498 = sbr.rel (0) target = $region57
    $region56: #{multimodal_forward.1} parent=1 // pred_region
      _
    $region57: #{multimodal_forward.1} parent=1 // pred_fallthru
      _
    // Predicated region
    $region58: #{multimodal_forward.1} parent=1 // pred_check
      _
    $region59: #{multimodal_forward.1} parent=1 // pred_check_branch
      %2500 = sbr.rel (0) target = $region61
    $region60: #{multimodal_forward.1} parent=1 // pred_region
      %2502 = dma.done [#allocation4], 128
    $region61: #{multimodal_forward.1} parent=1 // pred_fallthru
      _
    // Predicated region
    $region62: #{multimodal_forward.1} parent=1 // pred_check
      _
    $region63: #{multimodal_forward.1} parent=1 // pred_check_branch
      %2504 = sbr.rel (0) target = $region65
    $region64: #{multimodal_forward.1} parent=1 // pred_region
      _
    $region65: #{multimodal_forward.1} parent=1 // pred_fallthru
      _
    %2505 = vsyncpa [#allocation4], 1

</llo_original>
